<compile_context>
chip_gen: v6e
topology: v6e:2x2x1
jax: 0.10.0
libtpu: 0.0.40
codegen_flags: <defaults>
</compile_context>

<pallas_src>
import functools
import math

import numpy as np
import jax
import jax.numpy as jnp
from jax.experimental import pallas as pl
from jax.experimental.pallas import tpu as pltpu


_STREAM_WEIGHT_BYTES = 24 * 1024 * 1024   # auto-switch to layer streaming above this


def _round_up(x, m):
    return (x + m - 1) // m * m


def _vmem_limit_bytes():
    """Generation-aware scoped-VMEM bump (compiler defaults are only 16/32 MiB)."""
    try:
        cap = pltpu.get_tpu_info().vmem_capacity_bytes
        return int(min(100 * 1024 * 1024, cap * 3 // 4))
    except Exception:
        # 48 MiB fallback: safe on v7x (64 MiB physical VMEM) and conservative elsewhere.
        return 48 * 1024 * 1024


def _choose_tile(rows, tm):
    """Batch tile: multiple of 16 (bf16 LHS packs 16 sublanes per vreg), and split so
    the 'parallel' batch axis has >= 2 grid steps whenever rows allow -- keeps both
    TensorCores busy on dual-core chips (v7x) at ~0.35us/step cost on single-core chips."""
    rows_a = _round_up(max(rows, 1), 16)
    tm_eff = min(_round_up(max(tm, 16), 16), rows_a)
    steps = -(-rows_a // tm_eff)
    if steps < 2 and rows_a >= 32:
        tm_eff = _round_up(-(-rows_a // 2), 16)
    return tm_eff


# --------------------------------------------------------------------------------------
# Kernels
# --------------------------------------------------------------------------------------

def _resident_kernel(x_ref, w_in_ref, b_in_ref, ws_ref, bs_ref, o_ref, *,
                     num_rem, relu_first):
    """All remaining hidden layers resident in VMEM.

    x_ref    : (TM, 1)                input distances (in_features == 1)
    w_in_ref : (1, D)  f32            fused (linear_in . layer0) weight row
    b_in_ref : (1, D)  f32            fused bias row
    ws_ref   : (max(num_rem,1), D, D) bf16  remaining hidden weights, (in, out) layout
    bs_ref   : (max(num_rem,1), 1, D) f32
    o_ref    : (TM, D)
    """
    w_dtype = ws_ref.dtype

    # Fused affine (linear_in folded with hidden layer 0): a VPU lane-broadcast
    # mul-add -- not a degenerate K=1 MXU matmul.
    x = x_ref[...].astype(jnp.float32)
    mid_f32 = x * w_in_ref[...] + b_in_ref[...]
    if relu_first:
        mid_f32 = jnp.maximum(mid_f32, 0.0)

    def layer(m_lowp, w, b, out_dtype):
        h = jnp.dot(m_lowp, w, preferred_element_type=jnp.float32)  # bf16 MXU, f32 acc
        return jnp.maximum(h + b, 0.0).astype(out_dtype)            # bias+ReLU in f32 (VPU)

    if num_rem == 0:
        out = mid_f32
    else:
        mid = mid_f32.astype(w_dtype)          # carry activations in bf16 between layers
        if num_rem <= 8:
            # Fully unrolled: LLO scheduler sees all layers.
            for i in range(num_rem - 1):
                mid = layer(mid, ws_ref[i], bs_ref[i], w_dtype)
        else:
            # Deep configs: bound live ranges; unroll=2 lets layer i's VPU tail overlap
            # layer i+1's MXU staging.
            mid = jax.lax.fori_loop(
                0, num_rem - 1,
                lambda i, m: layer(m, ws_ref[i], bs_ref[i], w_dtype),
                mid, unroll=2)
        # Last layer: keep the result in f32 for the store (no extra bf16 rounding).
        out = layer(mid, ws_ref[num_rem - 1], bs_ref[num_rem - 1], jnp.float32)

    o_ref[...] = out.astype(o_ref.dtype)


def _stream_kernel(x_ref, w_in_ref, b_in_ref, w_ref, b_ref, o_ref, act_ref, *,
                   relu_first):
    """One hidden layer per inner grid step; weights streamed layer-by-layer.

    Grid = (batch_tiles, num_rem), semantics ("parallel", "arbitrary").
    w_ref  : (1, D, D) bf16  this layer's weight (in, out); next layer prefetched by pipeline
    b_ref  : (1, 1, D) f32
    act_ref: VMEM scratch (TM, D) -- activation carried across the layer axis.
    """
    l = pl.program_id(1)
    last = l == pl.num_programs(1) - 1

    @pl.when(l == 0)
    def _():
        x = x_ref[...].astype(jnp.float32)
        mid = x * w_in_ref[...] + b_in_ref[...]
        if relu_first:
            mid = jnp.maximum(mid, 0.0)
        act_ref[...] = mid.astype(act_ref.dtype)

    h = jnp.dot(act_ref[...], w_ref[0], preferred_element_type=jnp.float32)
    h = jnp.maximum(h + b_ref[0], 0.0)

    @pl.when(jnp.logical_not(last))
    def _():
        act_ref[...] = h.astype(act_ref.dtype)

    @pl.when(last)
    def _():
        o_ref[...] = h.astype(o_ref.dtype)


# --------------------------------------------------------------------------------------
# pallas_call wrapper
# --------------------------------------------------------------------------------------

@functools.partial(
    jax.jit,
    static_argnames=("tm", "num_rem", "relu_first", "stream", "single_buffer", "out_dtype"))
def _forward_impl(x2d, w_in, b_in, ws, bs, *, tm, num_rem, relu_first, stream,
                  single_buffer, out_dtype):
    rows = x2d.shape[0]
    D = w_in.shape[-1]
    rows_p = _round_up(rows, tm)
    if rows_p != rows:
        x2d = jnp.pad(x2d, ((0, rows_p - rows), (0, 0)))
    n_tiles = rows_p // tm

    def const_spec(shape):
        # Grid-invariant parameter block: single-buffering it halves its VMEM footprint
        # (the dominant consumer for large L*D^2); double-buffering a constant block
        # buys nothing.  Falls back to the default if Buffered(1) is unsupported.
        if single_buffer:
            return pl.BlockSpec(shape, lambda *_: (0,) * len(shape),
                                pipeline_mode=pl.Buffered(1))
        return pl.BlockSpec(shape, lambda *_: (0,) * len(shape))

    nbytes = lambda a: a.size * a.dtype.itemsize
    cost = pl.CostEstimate(
        flops=2 * rows_p * D + 2 * num_rem * rows_p * D * D,
        transcendentals=0,
        bytes_accessed=(nbytes(x2d) + nbytes(w_in) + nbytes(b_in) + nbytes(ws)
                        + nbytes(bs) + rows_p * D * np.dtype(out_dtype).itemsize))

    compiler_params = pltpu.CompilerParams(
        dimension_semantics=("parallel", "arbitrary") if stream else ("parallel",),
        vmem_limit_bytes=_vmem_limit_bytes())

    if stream:
        grid_spec = pltpu.PrefetchScalarGridSpec(
            num_scalar_prefetch=0,
            grid=(n_tiles, num_rem),                      # layer axis innermost
            in_specs=[
                pl.BlockSpec((tm, 1), lambda i, l: (i, 0)),
                const_spec((1, D)),
                const_spec((1, D)),
                pl.BlockSpec((1, D, D), lambda i, l: (l, 0, 0)),   # stream layer l weights
                pl.BlockSpec((1, 1, D), lambda i, l: (l, 0, 0)),
            ],
            out_specs=pl.BlockSpec((tm, D), lambda i, l: (i, 0)),
            scratch_shapes=[pltpu.VMEM((tm, D), ws.dtype)],        # activation carry
        )
        kernel = functools.partial(_stream_kernel, relu_first=relu_first)
    else:
        n_blk = ws.shape[0]
        grid_spec = pltpu.PrefetchScalarGridSpec(
            num_scalar_prefetch=0,
            grid=(n_tiles,),
            in_specs=[
                pl.BlockSpec((tm, 1), lambda i: (i, 0)),
                const_spec((1, D)),
                const_spec((1, D)),
                const_spec((n_blk, D, D)),                # resident hidden weights (bf16)
                const_spec((n_blk, 1, D)),
            ],
            out_specs=pl.BlockSpec((tm, D), lambda i: (i, 0)),     # lane-dense stores
        )
        kernel = functools.partial(_resident_kernel, num_rem=num_rem,
                                   relu_first=relu_first)

    out = pl.pallas_call(
        kernel,
        out_shape=jax.ShapeDtypeStruct((rows_p, D), out_dtype),
        grid_spec=grid_spec,
        compiler_params=compiler_params,
        cost_estimate=cost,
    )(x2d, w_in, b_in, ws, bs)
    return out[:rows]


_SINGLE_BUFFER_OK = None   # lazily resolved: does this Pallas accept pl.Buffered(1)?


def dis_projector_forward(dis, w_in, b_in, ws, bs, *, relu_first=True, tm=512,
                          out_dtype=None, stream_layers=None):
    """dis: (..., 1).  Parameters already in kernel layout (see convert_torch_params).

    tm:            batch tile (rows). 512 suits v5e/v6e; the >=2-grid-step split keeps
                   both TensorCores fed on v7x.
    out_dtype:     output dtype (pass jnp.bfloat16 to halve the HBM writeback when the
                   consumer tolerates it); defaults to dis.dtype.
    stream_layers: None = auto (stream hidden weights per layer when they exceed
                   ~24 MiB of bf16); True/False forces the choice.
    """
    global _SINGLE_BUFFER_OK
    assert dis.shape[-1] == 1, "dis_projector expects a trailing feature dim of 1"
    lead = dis.shape[:-1]
    rows = math.prod(lead) if lead else 1
    D = w_in.shape[-1]
    num_rem = int(ws.shape[0])
    if out_dtype is None:
        out_dtype = dis.dtype

    if num_rem == 0:
        # L <= 1 after the fold: keep a tiny dummy hidden-weight block so the kernel
        # signature stays uniform; static num_rem=0 skips the layer loop entirely.
        ws = jnp.zeros((1, D, D), ws.dtype)
        bs = jnp.zeros((1, 1, D), jnp.float32)

    if stream_layers is None:
        stream_layers = (num_rem >= 2
                         and ws.size * ws.dtype.itemsize > _STREAM_WEIGHT_BYTES)
    stream = bool(stream_layers) and num_rem >= 1

    x2d = dis.reshape(-1, 1)
    tm_eff = _choose_tile(rows, tm)

    static = dict(tm=tm_eff, num_rem=num_rem, relu_first=bool(relu_first),
                  stream=stream, out_dtype=out_dtype)
    if _SINGLE_BUFFER_OK is not False:
        try:
            out2d = _forward_impl(x2d, w_in, b_in, ws, bs, single_buffer=True, **static)
            _SINGLE_BUFFER_OK = True
        except Exception:
            # Installed Pallas rejected Buffered(1): fall back to default buffering once
            # and remember the decision.
            _SINGLE_BUFFER_OK = False
            out2d = _forward_impl(x2d, w_in, b_in, ws, bs, single_buffer=False, **static)
    else:
        out2d = _forward_impl(x2d, w_in, b_in, ws, bs, single_buffer=False, **static)

    return out2d.reshape(lead + (D,))


# --------------------------------------------------------------------------------------
# Parameter conversion (one-time, at load -- never on the hot path)
# --------------------------------------------------------------------------------------

def convert_torch_params(w_in_pt, b_in_pt, ws_pt, bs_pt, *, matmul_dtype=jnp.bfloat16):
    """PyTorch nn.Linear layout -> kernel layout, folding linear_in into hidden layer 0.

      w_in_pt: (D, 1)            b_in_pt: (D,)
      ws_pt:   (L, D, D) (out,in)  bs_pt: (L, D)

    Returns (w_fused (1,D) f32, b_fused (1,D) f32,
             ws_rem (L-1, D, D) (in,out) matmul_dtype, bs_rem (L-1, 1, D) f32,
             relu_first: bool).
    The fold is exact in f32: relu(linear0(linear_in(x))) == relu(x * w_fused + b_fused).
    """
    D = w_in_pt.shape[0]
    L = int(ws_pt.shape[0])
    w_row = jnp.asarray(w_in_pt, jnp.float32).reshape(1, D)   # (D,1) -> (1,D)
    b_row = jnp.asarray(b_in_pt, jnp.float32).reshape(1, D)
    if L >= 1:
        w0t = jnp.asarray(ws_pt[0], jnp.float32).T             # (in, out)
        w_fused = w_row @ w0t
        b_fused = b_row @ w0t + jnp.asarray(bs_pt[0], jnp.float32).reshape(1, D)
        ws_rem = jnp.transpose(jnp.asarray(ws_pt[1:]), (0, 2, 1)).astype(matmul_dtype)
        bs_rem = jnp.asarray(bs_pt[1:], jnp.float32).reshape(L - 1, 1, D)
        relu_first = True
    else:
        w_fused, b_fused = w_row, b_row
        ws_rem = jnp.zeros((0, D, D), matmul_dtype)
        bs_rem = jnp.zeros((0, 1, D), jnp.float32)
        relu_first = False
    return w_fused, b_fused, ws_rem, bs_rem, relu_first


def dis_projector_reference(dis, w_in_pt, b_in_pt, ws_pt, bs_pt):
    """Pure-JAX f32 reference mirroring the PyTorch forward exactly."""
    mid = dis @ w_in_pt.T + b_in_pt
    for i in range(ws_pt.shape[0]):
        mid = jax.nn.relu(mid @ ws_pt[i].T + bs_pt[i])
    return mid


if __name__ == "__main__":
    # Small config consistent with the module (nn.Linear(1, D) => trailing feature dim 1).
    # D lane-dense (multiple of 128); 512 rows -> two grid steps after the >=2-step split.
    batch, seq = 4, 128
    disProj_dim, disProj_layers = 128, 3

    key = jax.random.PRNGKey(0)
    kx, kwi, kbi, kws, kbs = jax.random.split(key, 5)

    dis = jax.random.normal(kx, (batch, seq, 1), dtype=jnp.float32)

    # PyTorch-convention parameters (nn.Linear stores W as (out_features, in_features)).
    w_in_pt = jax.random.uniform(kwi, (disProj_dim, 1), jnp.float32, -1.0, 1.0)
    b_in_pt = jax.random.uniform(kbi, (disProj_dim,), jnp.float32, -1.0, 1.0)
    bound = disProj_dim ** -0.5
    ws_pt = jax.random.uniform(kws, (disProj_layers, disProj_dim, disProj_dim),
                               jnp.float32, -bound, bound)
    bs_pt = jax.random.uniform(kbs, (disProj_layers, disProj_dim),
                               jnp.float32, -bound, bound)

    # One-time conversion: fold linear_in into hidden layer 0, transpose + bf16-cast.
    w_in, b_in, ws, bs, relu_first = convert_torch_params(w_in_pt, b_in_pt, ws_pt, bs_pt)

    ref = dis_projector_reference(dis, w_in_pt, b_in_pt, ws_pt, bs_pt)

    # Resident-weights path (the default for small L*D^2).
    out = dis_projector_forward(dis, w_in, b_in, ws, bs, relu_first=relu_first, tm=512)
    out = jax.block_until_ready(out)
    assert out.shape == (batch, seq, disProj_dim)
    err = jnp.max(jnp.abs(out - ref))
    assert jnp.allclose(out, ref, atol=5e-2, rtol=5e-2), (
        f"resident path mismatch vs reference, max abs err = {err}")

    # Layer-streaming path (auto-enabled only for large L*D^2; forced here to test it).
    out_s = dis_projector_forward(dis, w_in, b_in, ws, bs, relu_first=relu_first,
                                  tm=512, stream_layers=True)
    out_s = jax.block_until_ready(out_s)
    err_s = jnp.max(jnp.abs(out_s - ref))
    assert jnp.allclose(out_s, ref, atol=5e-2, rtol=5e-2), (
        f"streaming path mismatch vs reference, max abs err = {err_s}")

    print("KERNEL_OK")
</pallas_src>

<mosaic_0001>
module attributes {stable_mosaic.version = 11 : i64} {
  func.func @_resident_kernel(%arg0: i32, %arg1: memref<256x1xf32, #tpu.memory_space<vmem>>, %arg2: memref<1x128xf32, #tpu.memory_space<vmem>>, %arg3: memref<1x128xf32, #tpu.memory_space<vmem>>, %arg4: memref<2x128x128xbf16, #tpu.memory_space<vmem>>, %arg5: memref<2x1x128xf32, #tpu.memory_space<vmem>>, %arg6: memref<256x128xf32, #tpu.memory_space<vmem>>) attributes {dimension_semantics = [#tpu.dimension_semantics<parallel>], iteration_bounds = array<i64: 2>, scalar_prefetch = 0 : i64, scratch_operands = 0 : i64, tpu.core_type = #tpu.core_type<tc>, window_params = [{transform_indices = @transform_0, window_bounds = array<i64: 256, 1>}, {pipeline_mode = #tpu.pipeline_mode<synchronous>, transform_indices = @transform_1, window_bounds = array<i64: 1, 128>}, {pipeline_mode = #tpu.pipeline_mode<synchronous>, transform_indices = @transform_2, window_bounds = array<i64: 1, 128>}, {pipeline_mode = #tpu.pipeline_mode<synchronous>, transform_indices = @transform_3, window_bounds = array<i64: 2, 128, 128>}, {pipeline_mode = #tpu.pipeline_mode<synchronous>, transform_indices = @transform_4, window_bounds = array<i64: 2, 1, 128>}, {transform_indices = @transform_5, window_bounds = array<i64: 256, 128>}]} {
    %c0 = arith.constant 0 : index
    %c0_0 = arith.constant 0 : index
    %0 = vector.load %arg1[%c0, %c0_0] : memref<256x1xf32, #tpu.memory_space<vmem>>, vector<256x1xf32>
    %c0_1 = arith.constant 0 : index
    %c0_2 = arith.constant 0 : index
    %1 = vector.load %arg2[%c0_1, %c0_2] : memref<1x128xf32, #tpu.memory_space<vmem>>, vector<1x128xf32>
    %2 = vector.broadcast %0 : vector<256x1xf32> to vector<256x128xf32>
    %3 = vector.broadcast %1 : vector<1x128xf32> to vector<256x128xf32>
    %4 = arith.mulf %2, %3 : vector<256x128xf32>
    %c0_3 = arith.constant 0 : index
    %c0_4 = arith.constant 0 : index
    %5 = vector.load %arg3[%c0_3, %c0_4] : memref<1x128xf32, #tpu.memory_space<vmem>>, vector<1x128xf32>
    %6 = vector.broadcast %5 : vector<1x128xf32> to vector<256x128xf32>
    %7 = arith.addf %4, %6 : vector<256x128xf32>
    %cst = arith.constant 0.000000e+00 : f32
    %8 = vector.broadcast %cst : f32 to vector<256x128xf32>
    %9 = arith.maximumf %7, %8 : vector<256x128xf32>
    %10 = arith.truncf %9 : vector<256x128xf32> to vector<256x128xbf16>
    %c0_5 = arith.constant 0 : index
    %c0_6 = arith.constant 0 : index
    %c0_7 = arith.constant 0 : index
    %11 = vector.load %arg4[%c0_5, %c0_6, %c0_7] : memref<2x128x128xbf16, #tpu.memory_space<vmem>>, vector<1x128x128xbf16>
    %12 = vector.shape_cast %11 : vector<1x128x128xbf16> to vector<128x128xbf16>
    %c0_8 = arith.constant 0 : index
    %c0_9 = arith.constant 0 : index
    %c0_10 = arith.constant 0 : index
    %13 = vector.load %arg5[%c0_8, %c0_9, %c0_10] : memref<2x1x128xf32, #tpu.memory_space<vmem>>, vector<1x1x128xf32>
    %14 = vector.shape_cast %13 : vector<1x1x128xf32> to vector<1x128xf32>
    %cst_11 = arith.constant dense<0.000000e+00> : vector<256x128xf32>
    %15 = tpu.matmul %10, %12, %cst_11 {dimension_numbers = #tpu.dot_dimension_numbers<[1], [0], [0], [1], [0, 0, 1, 1], [], []>} : vector<256x128xbf16>, vector<128x128xbf16>, vector<256x128xf32> -> vector<256x128xf32>
    %16 = vector.broadcast %14 : vector<1x128xf32> to vector<256x128xf32>
    %17 = arith.addf %15, %16 : vector<256x128xf32>
    %cst_12 = arith.constant 0.000000e+00 : f32
    %18 = vector.broadcast %cst_12 : f32 to vector<256x128xf32>
    %19 = arith.maximumf %17, %18 : vector<256x128xf32>
    %20 = arith.truncf %19 : vector<256x128xf32> to vector<256x128xbf16>
    %c1 = arith.constant 1 : index
    %c0_13 = arith.constant 0 : index
    %c0_14 = arith.constant 0 : index
    %21 = vector.load %arg4[%c1, %c0_13, %c0_14] : memref<2x128x128xbf16, #tpu.memory_space<vmem>>, vector<1x128x128xbf16>
    %22 = vector.shape_cast %21 : vector<1x128x128xbf16> to vector<128x128xbf16>
    %c1_15 = arith.constant 1 : index
    %c0_16 = arith.constant 0 : index
    %c0_17 = arith.constant 0 : index
    %23 = vector.load %arg5[%c1_15, %c0_16, %c0_17] : memref<2x1x128xf32, #tpu.memory_space<vmem>>, vector<1x1x128xf32>
    %24 = vector.shape_cast %23 : vector<1x1x128xf32> to vector<1x128xf32>
    %cst_18 = arith.constant dense<0.000000e+00> : vector<256x128xf32>
    %25 = tpu.matmul %20, %22, %cst_18 {dimension_numbers = #tpu.dot_dimension_numbers<[1], [0], [0], [1], [0, 0, 1, 1], [], []>} : vector<256x128xbf16>, vector<128x128xbf16>, vector<256x128xf32> -> vector<256x128xf32>
    %26 = vector.broadcast %24 : vector<1x128xf32> to vector<256x128xf32>
    %27 = arith.addf %25, %26 : vector<256x128xf32>
    %cst_19 = arith.constant 0.000000e+00 : f32
    %28 = vector.broadcast %cst_19 : f32 to vector<256x128xf32>
    %29 = arith.maximumf %27, %28 : vector<256x128xf32>
    %c0_20 = arith.constant 0 : index
    %c0_21 = arith.constant 0 : index
    %30 = vector.load %arg6[%c0_20, %c0_21] : memref<256x128xf32, #tpu.memory_space<vmem>>, vector<256x128xf32>
    tpu.vector_store %arg6[%c0_20, %c0_21], %29 {strides = array<i32>} : memref<256x128xf32, #tpu.memory_space<vmem>>, vector<256x128xf32>,
    return
  }
  func.func @transform_0(%arg0: i32) -> (i32, i32) {
    %c0_i32 = arith.constant 0 : i32
    %c0_i32_0 = arith.constant 0 : i32
    return %arg0, %c0_i32 : i32, i32
  }
  func.func @transform_1(%arg0: i32) -> (i32, i32) {
    %c0_i32 = arith.constant 0 : i32
    %c0_i32_0 = arith.constant 0 : i32
    %c0_i32_1 = arith.constant 0 : i32
    return %c0_i32, %c0_i32_0 : i32, i32
  }
  func.func @transform_2(%arg0: i32) -> (i32, i32) {
    %c0_i32 = arith.constant 0 : i32
    %c0_i32_0 = arith.constant 0 : i32
    %c0_i32_1 = arith.constant 0 : i32
    return %c0_i32, %c0_i32_0 : i32, i32
  }
  func.func @transform_3(%arg0: i32) -> (i32, i32, i32) {
    %c0_i32 = arith.constant 0 : i32
    %c0_i32_0 = arith.constant 0 : i32
    %c0_i32_1 = arith.constant 0 : i32
    %c0_i32_2 = arith.constant 0 : i32
    return %c0_i32, %c0_i32_0, %c0_i32_1 : i32, i32, i32
  }
  func.func @transform_4(%arg0: i32) -> (i32, i32, i32) {
    %c0_i32 = arith.constant 0 : i32
    %c0_i32_0 = arith.constant 0 : i32
    %c0_i32_1 = arith.constant 0 : i32
    %c0_i32_2 = arith.constant 0 : i32
    return %c0_i32, %c0_i32_0, %c0_i32_1 : i32, i32, i32
  }
  func.func @transform_5(%arg0: i32) -> (i32, i32) {
    %c0_i32 = arith.constant 0 : i32
    %c0_i32_0 = arith.constant 0 : i32
    return %arg0, %c0_i32 : i32, i32
  }
}

module attributes {stable_mosaic.version = 11 : i64} {
  func.func @_resident_kernel(%arg0: i32, %arg1: memref<256x1xf32, #tpu.memory_space<vmem>>, %arg2: memref<1x128xf32, #tpu.memory_space<vmem>>, %arg3: memref<1x128xf32, #tpu.memory_space<vmem>>, %arg4: memref<2x128x128xbf16, #tpu.memory_space<vmem>>, %arg5: memref<2x1x128xf32, #tpu.memory_space<vmem>>, %arg6: memref<256x128xf32, #tpu.memory_space<vmem>>) attributes {dimension_semantics = [#tpu.dimension_semantics<parallel>], iteration_bounds = array<i64: 2>, scalar_prefetch = 0 : i64, scratch_operands = 0 : i64, tpu.core_type = #tpu.core_type<tc>, window_params = [{transform_indices = @transform_0, window_bounds = array<i64: 256, 1>}, {pipeline_mode = #tpu.pipeline_mode<synchronous>, transform_indices = @transform_1, window_bounds = array<i64: 1, 128>}, {pipeline_mode = #tpu.pipeline_mode<synchronous>, transform_indices = @transform_2, window_bounds = array<i64: 1, 128>}, {pipeline_mode = #tpu.pipeline_mode<synchronous>, transform_indices = @transform_3, window_bounds = array<i64: 2, 128, 128>}, {pipeline_mode = #tpu.pipeline_mode<synchronous>, transform_indices = @transform_4, window_bounds = array<i64: 2, 1, 128>}, {transform_indices = @transform_5, window_bounds = array<i64: 256, 128>}]} {
    %c0 = arith.constant 0 : index
    %c0_0 = arith.constant 0 : index
    %0 = vector.load %arg1[%c0, %c0_0] : memref<256x1xf32, #tpu.memory_space<vmem>>, vector<256x1xf32>
    %c0_1 = arith.constant 0 : index
    %c0_2 = arith.constant 0 : index
    %1 = vector.load %arg2[%c0_1, %c0_2] : memref<1x128xf32, #tpu.memory_space<vmem>>, vector<1x128xf32>
    %2 = vector.broadcast %0 : vector<256x1xf32> to vector<256x128xf32>
    %3 = vector.broadcast %1 : vector<1x128xf32> to vector<256x128xf32>
    %4 = arith.mulf %2, %3 : vector<256x128xf32>
    %c0_3 = arith.constant 0 : index
    %c0_4 = arith.constant 0 : index
    %5 = vector.load %arg3[%c0_3, %c0_4] : memref<1x128xf32, #tpu.memory_space<vmem>>, vector<1x128xf32>
    %6 = vector.broadcast %5 : vector<1x128xf32> to vector<256x128xf32>
    %7 = arith.addf %4, %6 : vector<256x128xf32>
    %cst = arith.constant 0.000000e+00 : f32
    %8 = vector.broadcast %cst : f32 to vector<256x128xf32>
    %9 = arith.maximumf %7, %8 : vector<256x128xf32>
    %10 = arith.truncf %9 : vector<256x128xf32> to vector<256x128xbf16>
    %c0_5 = arith.constant 0 : index
    %c0_6 = arith.constant 0 : index
    %c0_7 = arith.constant 0 : index
    %11 = vector.load %arg4[%c0_5, %c0_6, %c0_7] : memref<2x128x128xbf16, #tpu.memory_space<vmem>>, vector<1x128x128xbf16>
    %12 = vector.shape_cast %11 : vector<1x128x128xbf16> to vector<128x128xbf16>
    %c0_8 = arith.constant 0 : index
    %c0_9 = arith.constant 0 : index
    %c0_10 = arith.constant 0 : index
    %13 = vector.load %arg5[%c0_8, %c0_9, %c0_10] : memref<2x1x128xf32, #tpu.memory_space<vmem>>, vector<1x1x128xf32>
    %14 = vector.shape_cast %13 : vector<1x1x128xf32> to vector<1x128xf32>
    %cst_11 = arith.constant dense<0.000000e+00> : vector<256x128xf32>
    %15 = tpu.matmul %10, %12, %cst_11 {dimension_numbers = #tpu.dot_dimension_numbers<[1], [0], [0], [1], [0, 0, 1, 1], [], []>} : vector<256x128xbf16>, vector<128x128xbf16>, vector<256x128xf32> -> vector<256x128xf32>
    %16 = vector.broadcast %14 : vector<1x128xf32> to vector<256x128xf32>
    %17 = arith.addf %15, %16 : vector<256x128xf32>
    %cst_12 = arith.constant 0.000000e+00 : f32
    %18 = vector.broadcast %cst_12 : f32 to vector<256x128xf32>
    %19 = arith.maximumf %17, %18 : vector<256x128xf32>
    %20 = arith.truncf %19 : vector<256x128xf32> to vector<256x128xbf16>
    %c1 = arith.constant 1 : index
    %c0_13 = arith.constant 0 : index
    %c0_14 = arith.constant 0 : index
    %21 = vector.load %arg4[%c1, %c0_13, %c0_14] : memref<2x128x128xbf16, #tpu.memory_space<vmem>>, vector<1x128x128xbf16>
    %22 = vector.shape_cast %21 : vector<1x128x128xbf16> to vector<128x128xbf16>
    %c1_15 = arith.constant 1 : index
    %c0_16 = arith.constant 0 : index
    %c0_17 = arith.constant 0 : index
    %23 = vector.load %arg5[%c1_15, %c0_16, %c0_17] : memref<2x1x128xf32, #tpu.memory_space<vmem>>, vector<1x1x128xf32>
    %24 = vector.shape_cast %23 : vector<1x1x128xf32> to vector<1x128xf32>
    %cst_18 = arith.constant dense<0.000000e+00> : vector<256x128xf32>
    %25 = tpu.matmul %20, %22, %cst_18 {dimension_numbers = #tpu.dot_dimension_numbers<[1], [0], [0], [1], [0, 0, 1, 1], [], []>} : vector<256x128xbf16>, vector<128x128xbf16>, vector<256x128xf32> -> vector<256x128xf32>
    %26 = vector.broadcast %24 : vector<1x128xf32> to vector<256x128xf32>
    %27 = arith.addf %25, %26 : vector<256x128xf32>
    %cst_19 = arith.constant 0.000000e+00 : f32
    %28 = vector.broadcast %cst_19 : f32 to vector<256x128xf32>
    %29 = arith.maximumf %27, %28 : vector<256x128xf32>
    %c0_20 = arith.constant 0 : index
    %c0_21 = arith.constant 0 : index
    %30 = vector.load %arg6[%c0_20, %c0_21] : memref<256x128xf32, #tpu.memory_space<vmem>>, vector<256x128xf32>
    tpu.vector_store %arg6[%c0_20, %c0_21], %29 {strides = array<i32>} : memref<256x128xf32, #tpu.memory_space<vmem>>, vector<256x128xf32>,
    return
  }
  func.func @transform_0(%arg0: i32) -> (i32, i32) {
    %c0_i32 = arith.constant 0 : i32
    %c0_i32_0 = arith.constant 0 : i32
    return %arg0, %c0_i32 : i32, i32
  }
  func.func @transform_1(%arg0: i32) -> (i32, i32) {
    %c0_i32 = arith.constant 0 : i32
    %c0_i32_0 = arith.constant 0 : i32
    %c0_i32_1 = arith.constant 0 : i32
    return %c0_i32, %c0_i32_0 : i32, i32
  }
  func.func @transform_2(%arg0: i32) -> (i32, i32) {
    %c0_i32 = arith.constant 0 : i32
    %c0_i32_0 = arith.constant 0 : i32
    %c0_i32_1 = arith.constant 0 : i32
    return %c0_i32, %c0_i32_0 : i32, i32
  }
  func.func @transform_3(%arg0: i32) -> (i32, i32, i32) {
    %c0_i32 = arith.constant 0 : i32
    %c0_i32_0 = arith.constant 0 : i32
    %c0_i32_1 = arith.constant 0 : i32
    %c0_i32_2 = arith.constant 0 : i32
    return %c0_i32, %c0_i32_0, %c0_i32_1 : i32, i32, i32
  }
  func.func @transform_4(%arg0: i32) -> (i32, i32, i32) {
    %c0_i32 = arith.constant 0 : i32
    %c0_i32_0 = arith.constant 0 : i32
    %c0_i32_1 = arith.constant 0 : i32
    %c0_i32_2 = arith.constant 0 : i32
    return %c0_i32, %c0_i32_0, %c0_i32_1 : i32, i32, i32
  }
  func.func @transform_5(%arg0: i32) -> (i32, i32) {
    %c0_i32 = arith.constant 0 : i32
    %c0_i32_0 = arith.constant 0 : i32
    return %arg0, %c0_i32 : i32, i32
  }
}

</mosaic_0001>

<llo_original>
// kernel: _forward_impl.1
$region0: #{_forward_impl.1}
  #allocation0 [shape = 'u32[]', space=smem, size = 0x4, offset = 0x4, fixed_abs, tag = 'smem constant byte address 0x4 - core index']
  #allocation1 [shape = 'u32[144,128]{1,0:T(1,128)}', space=vmem, size = 0x12000, scoped, tag = 'internal scratch']
  %s0 = inlined_call_operand.vmem [shape: f32[512,1], index: 0, kind: input, shape index: {}]
  %s1 = inlined_call_operand.vmem [shape: f32[1,128], index: 1, kind: input, shape index: {}]
  %s2 = inlined_call_operand.vmem [shape: f32[1,128], index: 2, kind: input, shape index: {}]
  %s3 = inlined_call_operand.vmem [shape: bf16[2,128,128], index: 3, kind: input, shape index: {}]
  %s4 = inlined_call_operand.vmem [shape: f32[2,1,128], index: 4, kind: input, shape index: {}]
  %s5 = inlined_call_operand.hbm [shape: f32[512,128], index: 5, kind: output, shape index: {}]
  %s6 = sld [smem:[#allocation0]]
  $region53: #{_forward_impl.1} parent=0
    _
  %s8 = ssub.s32 1, %s6
  %s9 = scalar_select 0, %s8, %s6
  $region1: #{_forward_impl.1} parent=0
    #allocation2 [shape = 'u8[262144]{0}', space=vmem, size = 0x40000, scoped, tag = 'output window, operand 0']
    #allocation3 [shape = 's32[2]{0}', space=sflag, size = 0x8, scoped, tag = 'scoped memory for _forward_impl.1']
    %10 = vsyncpa [#allocation3], 0
    %s11 = scalar_lea.sflag [#allocation3], 1
    %12 = vsyncpa %s11, 0
    loop: start=0, step=1, limit=4
    $region2: #{_forward_impl.1} parent=1 // loop_pre_header
      _
    $region3: #{_forward_impl.1} parent=1 // loop_header
      %s14 = sphi 0, %s18
      %p15 = scmp.ge.s32.totalorder %s14, 4
      %s24 = sphi 0, %s26
      %s27 = sphi 0, %s24
      %s28 = sphi 0, %s27
      %s44 = sphi 0, %s28
      %s48 = sphi 0, %s48
      %s50 = sphi 0, %s48
      %s51 = sphi 0, %s50
      %s65 = sphi 0, %s51
      %s69 = sphi 0, %s69
      %s71 = sphi 0, %s69
      %s72 = sphi 0, %s71
      %s86 = sphi 0, %s72
      %s90 = sphi 0, %s90
      %s92 = sphi 0, %s90
      %s93 = sphi 0, %s92
      %s107 = sphi 0, %s93
      %s111 = sphi 0, %s111
      %s113 = sphi 0, %s111
      %s114 = sphi 0, %s113
      %s128 = sphi 0, %s114
      %s134 = sphi 0, %s136
      %s137 = sphi 0, %s134
      %s138 = sphi 0, %s137
      %s154 = sphi 0, %s138
    $region4: #{_forward_impl.1} parent=1 // loop_header_branch
      %17 = sbr.rel (%p15) target = $region8
    $region5: #{_forward_impl.1} parent=1 // loop_body
      %s19 = ssub.s32 %s14, 1
      %s20 = ssub.s32 %s14, 2
      %s21 = sadd.s32 %s14, 1
      %s22 = ssub.s32 %s14, %s21
      %p23 = scmp.eq.s32.totalorder %s22, 0
      %s25 = sadd.s32 %s24, 1
      %s26 = scalar_select %p23, %s24, %s25
      %p29 = pneg %p23
      %p30 = scmp.eq.s32.totalorder %s14, 1
      %p31 = por %p29, %p30
      %p32 = scmp.ne.s32.totalorder %s24, %s27
      %p33 = scmp.eq.s32.totalorder %s14, 0
      %p34 = por %p32, %p33
      %p35 = scmp.ne.s32.totalorder %s24, %s27
      %p36 = scmp.eq.s32.totalorder %s19, 1
      %p37 = por %p35, %p36
      %p38 = scmp.ne.s32.totalorder %s27, %s28
      %p39 = scmp.eq.s32.totalorder %s19, 0
      %p40 = por %p38, %p39
      %p41 = scmp.ne.s32.totalorder %s27, %s28
      %p42 = scmp.eq.s32.totalorder %s20, 1
      %p43 = por %p41, %p42
      %p45 = scmp.ne.s32.totalorder %s28, %s44
      %p46 = scmp.eq.s32.totalorder %s20, 0
      %p47 = por %p45, %p46
      %s49 = sadd.s32 %s48, 1
      %p52 = scmp.eq.s32.totalorder %s14, 1
      %p53 = scmp.ne.s32.totalorder %s48, %s50
      %p54 = scmp.eq.s32.totalorder %s14, 0
      %p55 = por %p53, %p54
      %p56 = scmp.ne.s32.totalorder %s48, %s50
      %p57 = scmp.eq.s32.totalorder %s19, 1
      %p58 = por %p56, %p57
      %p59 = scmp.ne.s32.totalorder %s50, %s51
      %p60 = scmp.eq.s32.totalorder %s19, 0
      %p61 = por %p59, %p60
      %p62 = scmp.ne.s32.totalorder %s50, %s51
      %p63 = scmp.eq.s32.totalorder %s20, 1
      %p64 = por %p62, %p63
      %p66 = scmp.ne.s32.totalorder %s51, %s65
      %p67 = scmp.eq.s32.totalorder %s20, 0
      %p68 = por %p66, %p67
      %s70 = sadd.s32 %s69, 1
      %p73 = scmp.eq.s32.totalorder %s14, 1
      %p74 = scmp.ne.s32.totalorder %s69, %s71
      %p75 = scmp.eq.s32.totalorder %s14, 0
      %p76 = por %p74, %p75
      %p77 = scmp.ne.s32.totalorder %s69, %s71
      %p78 = scmp.eq.s32.totalorder %s19, 1
      %p79 = por %p77, %p78
      %p80 = scmp.ne.s32.totalorder %s71, %s72
      %p81 = scmp.eq.s32.totalorder %s19, 0
      %p82 = por %p80, %p81
      %p83 = scmp.ne.s32.totalorder %s71, %s72
      %p84 = scmp.eq.s32.totalorder %s20, 1
      %p85 = por %p83, %p84
      %p87 = scmp.ne.s32.totalorder %s72, %s86
      %p88 = scmp.eq.s32.totalorder %s20, 0
      %p89 = por %p87, %p88
      %s91 = sadd.s32 %s90, 1
      %p94 = scmp.eq.s32.totalorder %s14, 1
      %p95 = scmp.ne.s32.totalorder %s90, %s92
      %p96 = scmp.eq.s32.totalorder %s14, 0
      %p97 = por %p95, %p96
      %p98 = scmp.ne.s32.totalorder %s90, %s92
      %p99 = scmp.eq.s32.totalorder %s19, 1
      %p100 = por %p98, %p99
      %p101 = scmp.ne.s32.totalorder %s92, %s93
      %p102 = scmp.eq.s32.totalorder %s19, 0
      %p103 = por %p101, %p102
      %p104 = scmp.ne.s32.totalorder %s92, %s93
      %p105 = scmp.eq.s32.totalorder %s20, 1
      %p106 = por %p104, %p105
      %p108 = scmp.ne.s32.totalorder %s93, %s107
      %p109 = scmp.eq.s32.totalorder %s20, 0
      %p110 = por %p108, %p109
      %s112 = sadd.s32 %s111, 1
      %p115 = scmp.eq.s32.totalorder %s14, 1
      %p116 = scmp.ne.s32.totalorder %s111, %s113
      %p117 = scmp.eq.s32.totalorder %s14, 0
      %p118 = por %p116, %p117
      %p119 = scmp.ne.s32.totalorder %s111, %s113
      %p120 = scmp.eq.s32.totalorder %s19, 1
      %p121 = por %p119, %p120
      %p122 = scmp.ne.s32.totalorder %s113, %s114
      %p123 = scmp.eq.s32.totalorder %s19, 0
      %p124 = por %p122, %p123
      %p125 = scmp.ne.s32.totalorder %s113, %s114
      %p126 = scmp.eq.s32.totalorder %s20, 1
      %p127 = por %p125, %p126
      %p129 = scmp.ne.s32.totalorder %s114, %s128
      %p130 = scmp.eq.s32.totalorder %s20, 0
      %p131 = por %p129, %p130
      %s132 = ssub.s32 %s14, %s21
      %p133 = scmp.eq.s32.totalorder %s132, 0
      %s135 = sadd.s32 %s134, 1
      %s136 = scalar_select %p133, %s134, %s135
      %p139 = pneg %p133
      %p140 = scmp.eq.s32.totalorder %s14, 1
      %p141 = por %p139, %p140
      %p142 = scmp.ne.s32.totalorder %s134, %s137
      %p143 = scmp.eq.s32.totalorder %s14, 0
      %p144 = por %p142, %p143
      %p145 = scmp.ne.s32.totalorder %s134, %s137
      %p146 = scmp.eq.s32.totalorder %s19, 1
      %p147 = por %p145, %p146
      %p148 = scmp.ne.s32.totalorder %s137, %s138
      %p149 = scmp.eq.s32.totalorder %s19, 0
      %p150 = por %p148, %p149
      %p151 = scmp.ne.s32.totalorder %s137, %s138
      %p152 = scmp.eq.s32.totalorder %s20, 1
      %p153 = por %p151, %p152
      %p155 = scmp.ne.s32.totalorder %s138, %s154
      %p156 = scmp.eq.s32.totalorder %s20, 0
      %p157 = por %p155, %p156
      %p158 = scmp.le.s32.totalorder 1, %s14
      %p159 = scmp.lt.s32.totalorder %s14, 3
      %p160 = pnand %p158, %p159
      %p161 = pneg %p160
      // Predicated region
      $region9: #{_forward_impl.1} parent=5 // pred_check
        _
      $region10: #{_forward_impl.1} parent=5 // pred_check_branch
        %163 = sbr.rel (%p160) target = $region12
      $region11: #{_forward_impl.1} parent=5 // pred_region
        %s164 = ssub.s32 %s14, 1
        // Predicated region
        $region13: #{_forward_impl.1} parent=11 // pred_check
          %p165 = pneg %p61
        $region14: #{_forward_impl.1} parent=11 // pred_check_branch
          %167 = sbr.rel (%p165) target = $region16
        $region15: #{_forward_impl.1} parent=11 // pred_region
          _
        $region16: #{_forward_impl.1} parent=11 // pred_fallthru
          _
        // Predicated region
        $region17: #{_forward_impl.1} parent=11 // pred_check
          %p168 = pneg %p82
        $region18: #{_forward_impl.1} parent=11 // pred_check_branch
          %170 = sbr.rel (%p168) target = $region20
        $region19: #{_forward_impl.1} parent=11 // pred_region
          _
        $region20: #{_forward_impl.1} parent=11 // pred_fallthru
          _
        // Predicated region
        $region21: #{_forward_impl.1} parent=11 // pred_check
          %p171 = pneg %p103
        $region22: #{_forward_impl.1} parent=11 // pred_check_branch
          %173 = sbr.rel (%p171) target = $region24
        $region23: #{_forward_impl.1} parent=11 // pred_region
          _
        $region24: #{_forward_impl.1} parent=11 // pred_fallthru
          _
        // Predicated region
        $region25: #{_forward_impl.1} parent=11 // pred_check
          %p174 = pneg %p124
        $region26: #{_forward_impl.1} parent=11 // pred_check_branch
          %176 = sbr.rel (%p174) target = $region28
        $region27: #{_forward_impl.1} parent=11 // pred_region
          _
        $region28: #{_forward_impl.1} parent=11 // pred_fallthru
          _
      $region12: #{_forward_impl.1} parent=5 // pred_fallthru
        _
      %p177 = scmp.lt.s32.totalorder %s14, 2
      // Predicated region
      $region29: #{_forward_impl.1} parent=5 // pred_check
        %p178 = pneg %p177
      $region30: #{_forward_impl.1} parent=5 // pred_check_branch
        %180 = sbr.rel (%p178) target = $region32
      $region31: #{_forward_impl.1} parent=5 // pred_region
        // Predicated region
        $region33: #{_forward_impl.1} parent=31 // pred_check
          %p181 = pneg %p34
        $region34: #{_forward_impl.1} parent=31 // pred_check_branch
          %183 = sbr.rel (%p181) target = $region36
        $region35: #{_forward_impl.1} parent=31 // pred_region
          %s184 = smul.u32 32, %s14
          %p185 = scmp.lt.s32.totalorder %s184, 63
          %s186 = scalar_select %p185, %s184, 63
          %s187 = smul.addr %s186, 8
          %s188 = scalar_lea.vmem %s0, %s187
          %s189 = smul.u32 32, %s14
        $region36: #{_forward_impl.1} parent=31 // pred_fallthru
          _
      $region32: #{_forward_impl.1} parent=5 // pred_fallthru
        _
      %p190 = scmp.le.s32.totalorder 1, %s14
      %p191 = scmp.lt.s32.totalorder %s14, 3
      %p192 = pnand %p190, %p191
      %p193 = pneg %p192
      // Predicated region
      $region37: #{_forward_impl.1} parent=5 // pred_check
        _
      $region38: #{_forward_impl.1} parent=5 // pred_check_branch
        %195 = sbr.rel (%p192) target = $region40
      $region39: #{_forward_impl.1} parent=5 // pred_region
        %s196 = ssub.s32 %s14, 1
        %s197 = smul.u32 32, %s19
        %p198 = scmp.lt.s32.totalorder %s197, 63
        %s199 = scalar_select %p198, %s197, 63
        %s200 = smul.addr %s199, 8
        %s201 = scalar_lea.vmem %s0, %s200
        %p202 = pneg %p40
        %p203 = pneg %p37
        %p204 = pneg %p61
        %p205 = pneg %p58
        %p206 = pneg %p82
        %p207 = pneg %p79
        %p208 = pneg %p103
        %p209 = pneg %p100
        %p210 = pneg %p124
        %p211 = pneg %p121
        %p212 = pneg %p150
        %p213 = pneg %p147
        %s214 = sand.u32 %s137, 1
        %s215 = scalar_lea.sflag [#allocation3], %s214
        %s216 = sand.u32 %s137, 1
        %s217 = smul.addr %s216, 256
        %s218 = scalar_lea.vmem [#allocation2], %s217
        %s219 = smul.u32 32, %s19
        %p220 = scmp.lt.s32.totalorder %s219, 63
        %s221 = scalar_select %p220, %s219, 63
        %s222 = smul.addr %s221, 8
        %s223 = scalar_lea.vmem %s0, %s222
        %s224 = smul.u32 32, %s19
        %s225 = smul.u32 32, %s19
        %v227 = vld [vmem:[%s223] sm:$0xff]
        %v228 = vld [vmem:[%s223 + $0x8] sm:$0xff]
        %v229 = vld [vmem:[%s223 + $0x10] sm:$0xff]
        %v230 = vld [vmem:[%s223 + $0x18] sm:$0xff]
        %v231 = vld [vmem:[%s223 + $0x20] sm:$0xff]
        %v232 = vld [vmem:[%s223 + $0x28] sm:$0xff]
        %v233 = vld [vmem:[%s223 + $0x30] sm:$0xff]
        %v234 = vld [vmem:[%s223 + $0x38] sm:$0xff]
        %v235 = vld [vmem:[%s223 + $0x40] sm:$0xff]
        %v236 = vld [vmem:[%s223 + $0x48] sm:$0xff]
        %v237 = vld [vmem:[%s223 + $0x50] sm:$0xff]
        %v238 = vld [vmem:[%s223 + $0x58] sm:$0xff]
        %v239 = vld [vmem:[%s223 + $0x60] sm:$0xff]
        %v240 = vld [vmem:[%s223 + $0x68] sm:$0xff]
        %v241 = vld [vmem:[%s223 + $0x70] sm:$0xff]
        %v242 = vld [vmem:[%s223 + $0x78] sm:$0xff]
        %v243 = vld [vmem:[%s223 + $0x80] sm:$0xff]
        %v244 = vld [vmem:[%s223 + $0x88] sm:$0xff]
        %v245 = vld [vmem:[%s223 + $0x90] sm:$0xff]
        %v246 = vld [vmem:[%s223 + $0x98] sm:$0xff]
        %v247 = vld [vmem:[%s223 + $0xa0] sm:$0xff]
        %v248 = vld [vmem:[%s223 + $0xa8] sm:$0xff]
        %v249 = vld [vmem:[%s223 + $0xb0] sm:$0xff]
        %v250 = vld [vmem:[%s223 + $0xb8] sm:$0xff]
        %v251 = vld [vmem:[%s223 + $0xc0] sm:$0xff]
        %v252 = vld [vmem:[%s223 + $0xc8] sm:$0xff]
        %v253 = vld [vmem:[%s223 + $0xd0] sm:$0xff]
        %v254 = vld [vmem:[%s223 + $0xd8] sm:$0xff]
        %v255 = vld [vmem:[%s223 + $0xe0] sm:$0xff]
        %v256 = vld [vmem:[%s223 + $0xe8] sm:$0xff]
        %v257 = vld [vmem:[%s223 + $0xf0] sm:$0xff]
        %v258 = vld [vmem:[%s223 + $0xf8] sm:$0xff]
        %v259 = vld [vmem:[%s1] sm:$0x1]
        %261 = vset.pattern.permute.xlu0 0
        %262 = vperm.xlu0 %261, %v227
        %v263 = vpop.permute.xlu0 %262
        %266 = vset.pattern.permute.xlu0 0
        %267 = vperm.xlu0 %266, %v228
        %v268 = vpop.permute.xlu0 %267
        %271 = vset.pattern.permute.xlu0 0
        %272 = vperm.xlu0 %271, %v229
        %v273 = vpop.permute.xlu0 %272
        %276 = vset.pattern.permute.xlu0 0
        %277 = vperm.xlu0 %276, %v230
        %v278 = vpop.permute.xlu0 %277
        %281 = vset.pattern.permute.xlu0 0
        %282 = vperm.xlu0 %281, %v231
        %v283 = vpop.permute.xlu0 %282
        %286 = vset.pattern.permute.xlu0 0
        %287 = vperm.xlu0 %286, %v232
        %v288 = vpop.permute.xlu0 %287
        %291 = vset.pattern.permute.xlu0 0
        %292 = vperm.xlu0 %291, %v233
        %v293 = vpop.permute.xlu0 %292
        %296 = vset.pattern.permute.xlu0 0
        %297 = vperm.xlu0 %296, %v234
        %v298 = vpop.permute.xlu0 %297
        %301 = vset.pattern.permute.xlu0 0
        %302 = vperm.xlu0 %301, %v235
        %v303 = vpop.permute.xlu0 %302
        %306 = vset.pattern.permute.xlu0 0
        %307 = vperm.xlu0 %306, %v236
        %v308 = vpop.permute.xlu0 %307
        %311 = vset.pattern.permute.xlu0 0
        %312 = vperm.xlu0 %311, %v237
        %v313 = vpop.permute.xlu0 %312
        %316 = vset.pattern.permute.xlu0 0
        %317 = vperm.xlu0 %316, %v238
        %v318 = vpop.permute.xlu0 %317
        %321 = vset.pattern.permute.xlu0 0
        %322 = vperm.xlu0 %321, %v239
        %v323 = vpop.permute.xlu0 %322
        %326 = vset.pattern.permute.xlu0 0
        %327 = vperm.xlu0 %326, %v240
        %v328 = vpop.permute.xlu0 %327
        %331 = vset.pattern.permute.xlu0 0
        %332 = vperm.xlu0 %331, %v241
        %v333 = vpop.permute.xlu0 %332
        %336 = vset.pattern.permute.xlu0 0
        %337 = vperm.xlu0 %336, %v242
        %v338 = vpop.permute.xlu0 %337
        %341 = vset.pattern.permute.xlu0 0
        %342 = vperm.xlu0 %341, %v243
        %v343 = vpop.permute.xlu0 %342
        %346 = vset.pattern.permute.xlu0 0
        %347 = vperm.xlu0 %346, %v244
        %v348 = vpop.permute.xlu0 %347
        %351 = vset.pattern.permute.xlu0 0
        %352 = vperm.xlu0 %351, %v245
        %v353 = vpop.permute.xlu0 %352
        %356 = vset.pattern.permute.xlu0 0
        %357 = vperm.xlu0 %356, %v246
        %v358 = vpop.permute.xlu0 %357
        %361 = vset.pattern.permute.xlu0 0
        %362 = vperm.xlu0 %361, %v247
        %v363 = vpop.permute.xlu0 %362
        %366 = vset.pattern.permute.xlu0 0
        %367 = vperm.xlu0 %366, %v248
        %v368 = vpop.permute.xlu0 %367
        %371 = vset.pattern.permute.xlu0 0
        %372 = vperm.xlu0 %371, %v249
        %v373 = vpop.permute.xlu0 %372
        %376 = vset.pattern.permute.xlu0 0
        %377 = vperm.xlu0 %376, %v250
        %v378 = vpop.permute.xlu0 %377
        %381 = vset.pattern.permute.xlu0 0
        %382 = vperm.xlu0 %381, %v251
        %v383 = vpop.permute.xlu0 %382
        %386 = vset.pattern.permute.xlu0 0
        %387 = vperm.xlu0 %386, %v252
        %v388 = vpop.permute.xlu0 %387
        %391 = vset.pattern.permute.xlu0 0
        %392 = vperm.xlu0 %391, %v253
        %v393 = vpop.permute.xlu0 %392
        %396 = vset.pattern.permute.xlu0 0
        %397 = vperm.xlu0 %396, %v254
        %v398 = vpop.permute.xlu0 %397
        %401 = vset.pattern.permute.xlu0 0
        %402 = vperm.xlu0 %401, %v255
        %v403 = vpop.permute.xlu0 %402
        %406 = vset.pattern.permute.xlu0 0
        %407 = vperm.xlu0 %406, %v256
        %v408 = vpop.permute.xlu0 %407
        %411 = vset.pattern.permute.xlu0 0
        %412 = vperm.xlu0 %411, %v257
        %v413 = vpop.permute.xlu0 %412
        %416 = vset.pattern.permute.xlu0 0
        %417 = vperm.xlu0 %416, %v258
        %v418 = vpop.permute.xlu0 %417
        %v421 = vlaneseq
        %v422 = vshrl.u32 %v421, 7
        %v423 = vsub.s32 0, %v422
        %v424 = vrot.slane %v259, %v423
        %v426 = vmul.f32 %v263, %v424
        %v427 = vmul.f32 %v268, %v424
        %v428 = vmul.f32 %v273, %v424
        %v429 = vmul.f32 %v278, %v424
        %v430 = vmul.f32 %v283, %v424
        %v431 = vmul.f32 %v288, %v424
        %v432 = vmul.f32 %v293, %v424
        %v433 = vmul.f32 %v298, %v424
        %v434 = vmul.f32 %v303, %v424
        %v435 = vmul.f32 %v308, %v424
        %v436 = vmul.f32 %v313, %v424
        %v437 = vmul.f32 %v318, %v424
        %v438 = vmul.f32 %v323, %v424
        %v439 = vmul.f32 %v328, %v424
        %v440 = vmul.f32 %v333, %v424
        %v441 = vmul.f32 %v338, %v424
        %v442 = vmul.f32 %v343, %v424
        %v443 = vmul.f32 %v348, %v424
        %v444 = vmul.f32 %v353, %v424
        %v445 = vmul.f32 %v358, %v424
        %v446 = vmul.f32 %v363, %v424
        %v447 = vmul.f32 %v368, %v424
        %v448 = vmul.f32 %v373, %v424
        %v449 = vmul.f32 %v378, %v424
        %v450 = vmul.f32 %v383, %v424
        %v451 = vmul.f32 %v388, %v424
        %v452 = vmul.f32 %v393, %v424
        %v453 = vmul.f32 %v398, %v424
        %v454 = vmul.f32 %v403, %v424
        %v455 = vmul.f32 %v408, %v424
        %v456 = vmul.f32 %v413, %v424
        %v457 = vmul.f32 %v418, %v424
        %v458 = vld [vmem:[%s2] sm:$0x1]
        %v460 = vlaneseq
        %v461 = vshrl.u32 %v460, 7
        %v462 = vsub.s32 0, %v461
        %v463 = vrot.slane %v458, %v462
        %v465 = vadd.f32 %v426, %v463
        %v466 = vadd.f32 %v427, %v463
        %v467 = vadd.f32 %v428, %v463
        %v468 = vadd.f32 %v429, %v463
        %v469 = vadd.f32 %v430, %v463
        %v470 = vadd.f32 %v431, %v463
        %v471 = vadd.f32 %v432, %v463
        %v472 = vadd.f32 %v433, %v463
        %v473 = vadd.f32 %v434, %v463
        %v474 = vadd.f32 %v435, %v463
        %v475 = vadd.f32 %v436, %v463
        %v476 = vadd.f32 %v437, %v463
        %v477 = vadd.f32 %v438, %v463
        %v478 = vadd.f32 %v439, %v463
        %v479 = vadd.f32 %v440, %v463
        %v480 = vadd.f32 %v441, %v463
        %v481 = vadd.f32 %v442, %v463
        %v482 = vadd.f32 %v443, %v463
        %v483 = vadd.f32 %v444, %v463
        %v484 = vadd.f32 %v445, %v463
        %v485 = vadd.f32 %v446, %v463
        %v486 = vadd.f32 %v447, %v463
        %v487 = vadd.f32 %v448, %v463
        %v488 = vadd.f32 %v449, %v463
        %v489 = vadd.f32 %v450, %v463
        %v490 = vadd.f32 %v451, %v463
        %v491 = vadd.f32 %v452, %v463
        %v492 = vadd.f32 %v453, %v463
        %v493 = vadd.f32 %v454, %v463
        %v494 = vadd.f32 %v455, %v463
        %v495 = vadd.f32 %v456, %v463
        %v496 = vadd.f32 %v457, %v463
        %v497 = vmax.f32 %v465, 0.0
        %v498 = vmax.f32 %v466, 0.0
        %v499 = vmax.f32 %v467, 0.0
        %v500 = vmax.f32 %v468, 0.0
        %v501 = vmax.f32 %v469, 0.0
        %v502 = vmax.f32 %v470, 0.0
        %v503 = vmax.f32 %v471, 0.0
        %v504 = vmax.f32 %v472, 0.0
        %v505 = vmax.f32 %v473, 0.0
        %v506 = vmax.f32 %v474, 0.0
        %v507 = vmax.f32 %v475, 0.0
        %v508 = vmax.f32 %v476, 0.0
        %v509 = vmax.f32 %v477, 0.0
        %v510 = vmax.f32 %v478, 0.0
        %v511 = vmax.f32 %v479, 0.0
        %v512 = vmax.f32 %v480, 0.0
        %v513 = vmax.f32 %v481, 0.0
        %v514 = vmax.f32 %v482, 0.0
        %v515 = vmax.f32 %v483, 0.0
        %v516 = vmax.f32 %v484, 0.0
        %v517 = vmax.f32 %v485, 0.0
        %v518 = vmax.f32 %v486, 0.0
        %v519 = vmax.f32 %v487, 0.0
        %v520 = vmax.f32 %v488, 0.0
        %v521 = vmax.f32 %v489, 0.0
        %v522 = vmax.f32 %v490, 0.0
        %v523 = vmax.f32 %v491, 0.0
        %v524 = vmax.f32 %v492, 0.0
        %v525 = vmax.f32 %v493, 0.0
        %v526 = vmax.f32 %v494, 0.0
        %v527 = vmax.f32 %v495, 0.0
        %v528 = vmax.f32 %v496, 0.0
        %v529 = vpack.c.bf16 %v498, %v497
        %v530 = vpack.c.bf16 %v500, %v499
        %v531 = vpack.c.bf16 %v502, %v501
        %v532 = vpack.c.bf16 %v504, %v503
        %v533 = vpack.c.bf16 %v506, %v505
        %v534 = vpack.c.bf16 %v508, %v507
        %v535 = vpack.c.bf16 %v510, %v509
        %v536 = vpack.c.bf16 %v512, %v511
        %v537 = vpack.c.bf16 %v514, %v513
        %v538 = vpack.c.bf16 %v516, %v515
        %v539 = vpack.c.bf16 %v518, %v517
        %v540 = vpack.c.bf16 %v520, %v519
        %v541 = vpack.c.bf16 %v522, %v521
        %v542 = vpack.c.bf16 %v524, %v523
        %v543 = vpack.c.bf16 %v526, %v525
        %v544 = vpack.c.bf16 %v528, %v527
        %v545 = vld [vmem:[%s3] sm:$0xf]
        %v546 = vld [vmem:[%s3 + $0x4] sm:$0xf]
        %v547 = vld [vmem:[%s3 + $0x8] sm:$0xf]
        %v548 = vld [vmem:[%s3 + $0xc] sm:$0xf]
        %v549 = vld [vmem:[%s3 + $0x10] sm:$0xf]
        %v550 = vld [vmem:[%s3 + $0x14] sm:$0xf]
        %v551 = vld [vmem:[%s3 + $0x18] sm:$0xf]
        %v552 = vld [vmem:[%s3 + $0x1c] sm:$0xf]
        %v553 = vld [vmem:[%s3 + $0x20] sm:$0xf]
        %v554 = vld [vmem:[%s3 + $0x24] sm:$0xf]
        %v555 = vld [vmem:[%s3 + $0x28] sm:$0xf]
        %v556 = vld [vmem:[%s3 + $0x2c] sm:$0xf]
        %v557 = vld [vmem:[%s3 + $0x30] sm:$0xf]
        %v558 = vld [vmem:[%s3 + $0x34] sm:$0xf]
        %v559 = vld [vmem:[%s3 + $0x38] sm:$0xf]
        %v560 = vld [vmem:[%s3 + $0x3c] sm:$0xf]
        %v561 = vld [vmem:[%s4] sm:$0x1]
        %v563 = vlaneseq
        %v564 = vshrl.u32 %v563, 7
        %v565 = vsub.s32 0, %v564
        %v566 = vrot.slane %v561, %v565
        %v584 = vunpack.c.l.b16 %v545
        %v585 = vunpack.c.l.b16 %v546
        %v586 = vunpack.c.l.b16 %v547
        %v587 = vunpack.c.l.b16 %v548
        %v588 = vunpack.c.l.b16 %v549
        %v589 = vunpack.c.l.b16 %v550
        %v590 = vunpack.c.l.b16 %v551
        %v591 = vunpack.c.l.b16 %v552
        %v592 = vunpack.c.l.b16 %v553
        %v593 = vunpack.c.l.b16 %v554
        %v594 = vunpack.c.l.b16 %v555
        %v595 = vunpack.c.l.b16 %v556
        %v596 = vunpack.c.l.b16 %v557
        %v597 = vunpack.c.l.b16 %v558
        %v598 = vunpack.c.l.b16 %v559
        %v599 = vunpack.c.l.b16 %v560
        %v600 = vpack.c.b16 %v585, %v584
        %v601 = vpack.c.b16 %v587, %v586
        %v602 = vpack.c.b16 %v589, %v588
        %v603 = vpack.c.b16 %v591, %v590
        %v604 = vpack.c.b16 %v593, %v592
        %v605 = vpack.c.b16 %v595, %v594
        %v606 = vpack.c.b16 %v597, %v596
        %v607 = vpack.c.b16 %v599, %v598
        %616 = vmatprep.subr.bf16.mxu0 0
        %617 = vmatpush1.bf16.msra.mxu0 %v607
        %618 = vmatprep.subr.bf16.mxu0 0
        %619 = vmatpush1.bf16.msra.mxu0 %v606
        %620 = vmatprep.subr.bf16.mxu0 0
        %621 = vmatpush1.bf16.msra.mxu0 %v605
        %622 = vmatprep.subr.bf16.mxu0 0
        %623 = vmatpush1.bf16.msra.mxu0 %v604
        %624 = vmatprep.subr.bf16.mxu0 0
        %625 = vmatpush1.bf16.msra.mxu0 %v603
        %626 = vmatprep.subr.bf16.mxu0 0
        %627 = vmatpush1.bf16.msra.mxu0 %v602
        %628 = vmatprep.subr.bf16.mxu0 0
        %629 = vmatpush1.bf16.msra.mxu0 %v601
        %630 = vmatprep.subr.bf16.mxu0 0
        %631 = vmatpush1.bf16.msra.mxu0 %v600
        %632 = vmatprep.subr.bf16.mxu0 0
        %633 = vmatpush2.bf16.msra.mxu0 0
        %634 = vmatprep.subr.bf16.mxu0 0
        %635 = vmatpush2.bf16.msra.mxu0 0
        %636 = vmatprep.subr.bf16.mxu0 0
        %637 = vmatpush2.bf16.msra.mxu0 0
        %638 = vmatprep.subr.bf16.mxu0 0
        %639 = vmatpush2.bf16.msra.mxu0 0
        %640 = vmatprep.subr.bf16.mxu0 0
        %641 = vmatpush2.bf16.msra.mxu0 0
        %642 = vmatprep.subr.bf16.mxu0 0
        %643 = vmatpush2.bf16.msra.mxu0 0
        %644 = vmatprep.subr.bf16.mxu0 0
        %645 = vmatpush2.bf16.msra.mxu0 0
        %646 = vmatprep.subr.bf16.mxu0 0
        %647 = vmatpush2.bf16.msra.mxu0 0
        %648 = vmatprep.mubr.bf16.mxu0 0
        %649 = vmatmul.mubr.bf16.gmra.mxu0 %v529
        %v650 = vpop.f32.mrf.mxu0
        %v651 = vadd.f32 %v566, %v650
        %v652 = vpop.f32.mrf.mxu0
        %v653 = vpop.f32.mrf.mxu0
        %v654 = vadd.f32 %v566, %v653
        %v655 = vpop.f32.mrf.mxu0
        %656 = vmatprep.mubr.bf16.mxu0 0
        %657 = vmatmul.mubr.bf16.gmra.mxu0 %v530
        %v658 = vpop.f32.mrf.mxu0
        %v659 = vadd.f32 %v566, %v658
        %v660 = vpop.f32.mrf.mxu0
        %v661 = vpop.f32.mrf.mxu0
        %v662 = vadd.f32 %v566, %v661
        %v663 = vpop.f32.mrf.mxu0
        %664 = vmatprep.mubr.bf16.mxu0 0
        %665 = vmatmul.mubr.bf16.gmra.mxu0 %v531
        %v666 = vpop.f32.mrf.mxu0
        %v667 = vadd.f32 %v566, %v666
        %v668 = vpop.f32.mrf.mxu0
        %v669 = vpop.f32.mrf.mxu0
        %v670 = vadd.f32 %v566, %v669
        %v671 = vpop.f32.mrf.mxu0
        %672 = vmatprep.mubr.bf16.mxu0 0
        %673 = vmatmul.mubr.bf16.gmra.mxu0 %v532
        %v674 = vpop.f32.mrf.mxu0
        %v675 = vadd.f32 %v566, %v674
        %v676 = vpop.f32.mrf.mxu0
        %v677 = vpop.f32.mrf.mxu0
        %v678 = vadd.f32 %v566, %v677
        %v679 = vpop.f32.mrf.mxu0
        %680 = vmatprep.mubr.bf16.mxu0 0
        %681 = vmatmul.mubr.bf16.gmra.mxu0 %v533
        %v682 = vpop.f32.mrf.mxu0
        %v683 = vadd.f32 %v566, %v682
        %v684 = vpop.f32.mrf.mxu0
        %v685 = vpop.f32.mrf.mxu0
        %v686 = vadd.f32 %v566, %v685
        %v687 = vpop.f32.mrf.mxu0
        %688 = vmatprep.mubr.bf16.mxu0 0
        %689 = vmatmul.mubr.bf16.gmra.mxu0 %v534
        %v690 = vpop.f32.mrf.mxu0
        %v691 = vadd.f32 %v566, %v690
        %v692 = vpop.f32.mrf.mxu0
        %v693 = vpop.f32.mrf.mxu0
        %v694 = vadd.f32 %v566, %v693
        %v695 = vpop.f32.mrf.mxu0
        %696 = vmatprep.mubr.bf16.mxu0 0
        %697 = vmatmul.mubr.bf16.gmra.mxu0 %v535
        %v698 = vpop.f32.mrf.mxu0
        %v699 = vadd.f32 %v566, %v698
        %v700 = vpop.f32.mrf.mxu0
        %v701 = vpop.f32.mrf.mxu0
        %v702 = vadd.f32 %v566, %v701
        %v703 = vpop.f32.mrf.mxu0
        %704 = vmatprep.mubr.bf16.mxu0 0
        %705 = vmatmul.mubr.bf16.gmra.mxu0 %v536
        %v706 = vpop.f32.mrf.mxu0
        %v707 = vadd.f32 %v566, %v706
        %v708 = vpop.f32.mrf.mxu0
        %v709 = vpop.f32.mrf.mxu0
        %v710 = vadd.f32 %v566, %v709
        %v711 = vpop.f32.mrf.mxu0
        %712 = vmatprep.mubr.bf16.mxu0 0
        %713 = vmatmul.mubr.bf16.gmra.mxu0 %v537
        %v714 = vpop.f32.mrf.mxu0
        %v715 = vadd.f32 %v566, %v714
        %v716 = vpop.f32.mrf.mxu0
        %v717 = vpop.f32.mrf.mxu0
        %v718 = vadd.f32 %v566, %v717
        %v719 = vpop.f32.mrf.mxu0
        %720 = vmatprep.mubr.bf16.mxu0 0
        %721 = vmatmul.mubr.bf16.gmra.mxu0 %v538
        %v722 = vpop.f32.mrf.mxu0
        %v723 = vadd.f32 %v566, %v722
        %v724 = vpop.f32.mrf.mxu0
        %v725 = vpop.f32.mrf.mxu0
        %v726 = vadd.f32 %v566, %v725
        %v727 = vpop.f32.mrf.mxu0
        %728 = vmatprep.mubr.bf16.mxu0 0
        %729 = vmatmul.mubr.bf16.gmra.mxu0 %v539
        %v730 = vpop.f32.mrf.mxu0
        %v731 = vadd.f32 %v566, %v730
        %v732 = vpop.f32.mrf.mxu0
        %v733 = vpop.f32.mrf.mxu0
        %v734 = vadd.f32 %v566, %v733
        %v735 = vpop.f32.mrf.mxu0
        %736 = vmatprep.mubr.bf16.mxu0 0
        %737 = vmatmul.mubr.bf16.gmra.mxu0 %v540
        %v738 = vpop.f32.mrf.mxu0
        %v739 = vadd.f32 %v566, %v738
        %v740 = vpop.f32.mrf.mxu0
        %v741 = vpop.f32.mrf.mxu0
        %v742 = vadd.f32 %v566, %v741
        %v743 = vpop.f32.mrf.mxu0
        %744 = vmatprep.mubr.bf16.mxu0 0
        %745 = vmatmul.mubr.bf16.gmra.mxu0 %v541
        %v746 = vpop.f32.mrf.mxu0
        %v747 = vadd.f32 %v566, %v746
        %v748 = vpop.f32.mrf.mxu0
        %v749 = vpop.f32.mrf.mxu0
        %v750 = vadd.f32 %v566, %v749
        %v751 = vpop.f32.mrf.mxu0
        %752 = vmatprep.mubr.bf16.mxu0 0
        %753 = vmatmul.mubr.bf16.gmra.mxu0 %v542
        %v754 = vpop.f32.mrf.mxu0
        %v755 = vadd.f32 %v566, %v754
        %v756 = vpop.f32.mrf.mxu0
        %v757 = vpop.f32.mrf.mxu0
        %v758 = vadd.f32 %v566, %v757
        %v759 = vpop.f32.mrf.mxu0
        %760 = vmatprep.mubr.bf16.mxu0 0
        %761 = vmatmul.mubr.bf16.gmra.mxu0 %v543
        %v762 = vpop.f32.mrf.mxu0
        %v763 = vadd.f32 %v566, %v762
        %v764 = vpop.f32.mrf.mxu0
        %v765 = vpop.f32.mrf.mxu0
        %v766 = vadd.f32 %v566, %v765
        %v767 = vpop.f32.mrf.mxu0
        %768 = vmatprep.mubr.bf16.mxu0 0
        %769 = vmatmul.mubr.bf16.gmra.mxu0 %v544
        %v770 = vpop.f32.mrf.mxu0
        %v771 = vadd.f32 %v566, %v770
        %v772 = vpop.f32.mrf.mxu0
        %v773 = vpop.f32.mrf.mxu0
        %v774 = vadd.f32 %v566, %v773
        %v775 = vpop.f32.mrf.mxu0
        %776 = vdwg.mxu0
        %v777 = vmax.f32 %v651, 0.0
        %v778 = vmax.f32 %v654, 0.0
        %v779 = vmax.f32 %v659, 0.0
        %v780 = vmax.f32 %v662, 0.0
        %v781 = vmax.f32 %v667, 0.0
        %v782 = vmax.f32 %v670, 0.0
        %v783 = vmax.f32 %v675, 0.0
        %v784 = vmax.f32 %v678, 0.0
        %v785 = vmax.f32 %v683, 0.0
        %v786 = vmax.f32 %v686, 0.0
        %v787 = vmax.f32 %v691, 0.0
        %v788 = vmax.f32 %v694, 0.0
        %v789 = vmax.f32 %v699, 0.0
        %v790 = vmax.f32 %v702, 0.0
        %v791 = vmax.f32 %v707, 0.0
        %v792 = vmax.f32 %v710, 0.0
        %v793 = vmax.f32 %v715, 0.0
        %v794 = vmax.f32 %v718, 0.0
        %v795 = vmax.f32 %v723, 0.0
        %v796 = vmax.f32 %v726, 0.0
        %v797 = vmax.f32 %v731, 0.0
        %v798 = vmax.f32 %v734, 0.0
        %v799 = vmax.f32 %v739, 0.0
        %v800 = vmax.f32 %v742, 0.0
        %v801 = vmax.f32 %v747, 0.0
        %v802 = vmax.f32 %v750, 0.0
        %v803 = vmax.f32 %v755, 0.0
        %v804 = vmax.f32 %v758, 0.0
        %v805 = vmax.f32 %v763, 0.0
        %v806 = vmax.f32 %v766, 0.0
        %v807 = vmax.f32 %v771, 0.0
        %v808 = vmax.f32 %v774, 0.0
        %v809 = vpack.c.bf16 %v778, %v777
        %v810 = vpack.c.bf16 %v780, %v779
        %v811 = vpack.c.bf16 %v782, %v781
        %v812 = vpack.c.bf16 %v784, %v783
        %v813 = vpack.c.bf16 %v786, %v785
        %v814 = vpack.c.bf16 %v788, %v787
        %v815 = vpack.c.bf16 %v790, %v789
        %v816 = vpack.c.bf16 %v792, %v791
        %v817 = vpack.c.bf16 %v794, %v793
        %v818 = vpack.c.bf16 %v796, %v795
        %v819 = vpack.c.bf16 %v798, %v797
        %v820 = vpack.c.bf16 %v800, %v799
        %v821 = vpack.c.bf16 %v802, %v801
        %v822 = vpack.c.bf16 %v804, %v803
        %v823 = vpack.c.bf16 %v806, %v805
        %v824 = vpack.c.bf16 %v808, %v807
        %s825 = scalar_lea.vmem %s3, 64
        %v826 = vld [vmem:[%s825] sm:$0xf]
        %v827 = vld [vmem:[%s825 + $0x4] sm:$0xf]
        %v828 = vld [vmem:[%s825 + $0x8] sm:$0xf]
        %v829 = vld [vmem:[%s825 + $0xc] sm:$0xf]
        %v830 = vld [vmem:[%s825 + $0x10] sm:$0xf]
        %v831 = vld [vmem:[%s825 + $0x14] sm:$0xf]
        %v832 = vld [vmem:[%s825 + $0x18] sm:$0xf]
        %v833 = vld [vmem:[%s825 + $0x1c] sm:$0xf]
        %v834 = vld [vmem:[%s825 + $0x20] sm:$0xf]
        %v835 = vld [vmem:[%s825 + $0x24] sm:$0xf]
        %v836 = vld [vmem:[%s825 + $0x28] sm:$0xf]
        %v837 = vld [vmem:[%s825 + $0x2c] sm:$0xf]
        %v838 = vld [vmem:[%s825 + $0x30] sm:$0xf]
        %v839 = vld [vmem:[%s825 + $0x34] sm:$0xf]
        %v840 = vld [vmem:[%s825 + $0x38] sm:$0xf]
        %v841 = vld [vmem:[%s825 + $0x3c] sm:$0xf]
        %s842 = scalar_lea.vmem %s4, 1
        %v843 = vld [vmem:[%s842] sm:$0x1]
        %v845 = vlaneseq
        %v846 = vshrl.u32 %v845, 7
        %v847 = vsub.s32 0, %v846
        %v848 = vrot.slane %v843, %v847
        %v866 = vunpack.c.l.b16 %v826
        %v867 = vunpack.c.l.b16 %v827
        %v868 = vunpack.c.l.b16 %v828
        %v869 = vunpack.c.l.b16 %v829
        %v870 = vunpack.c.l.b16 %v830
        %v871 = vunpack.c.l.b16 %v831
        %v872 = vunpack.c.l.b16 %v832
        %v873 = vunpack.c.l.b16 %v833
        %v874 = vunpack.c.l.b16 %v834
        %v875 = vunpack.c.l.b16 %v835
        %v876 = vunpack.c.l.b16 %v836
        %v877 = vunpack.c.l.b16 %v837
        %v878 = vunpack.c.l.b16 %v838
        %v879 = vunpack.c.l.b16 %v839
        %v880 = vunpack.c.l.b16 %v840
        %v881 = vunpack.c.l.b16 %v841
        %v882 = vpack.c.b16 %v867, %v866
        %v883 = vpack.c.b16 %v869, %v868
        %v884 = vpack.c.b16 %v871, %v870
        %v885 = vpack.c.b16 %v873, %v872
        %v886 = vpack.c.b16 %v875, %v874
        %v887 = vpack.c.b16 %v877, %v876
        %v888 = vpack.c.b16 %v879, %v878
        %v889 = vpack.c.b16 %v881, %v880
        %898 = vmatprep.subr.bf16.mxu0 0
        %899 = vmatpush1.bf16.msra.mxu0 %v889
        %900 = vmatprep.subr.bf16.mxu0 0
        %901 = vmatpush1.bf16.msra.mxu0 %v888
        %902 = vmatprep.subr.bf16.mxu0 0
        %903 = vmatpush1.bf16.msra.mxu0 %v887
        %904 = vmatprep.subr.bf16.mxu0 0
        %905 = vmatpush1.bf16.msra.mxu0 %v886
        %906 = vmatprep.subr.bf16.mxu0 0
        %907 = vmatpush1.bf16.msra.mxu0 %v885
        %908 = vmatprep.subr.bf16.mxu0 0
        %909 = vmatpush1.bf16.msra.mxu0 %v884
        %910 = vmatprep.subr.bf16.mxu0 0
        %911 = vmatpush1.bf16.msra.mxu0 %v883
        %912 = vmatprep.subr.bf16.mxu0 0
        %913 = vmatpush1.bf16.msra.mxu0 %v882
        %914 = vmatprep.subr.bf16.mxu0 0
        %915 = vmatpush2.bf16.msra.mxu0 0
        %916 = vmatprep.subr.bf16.mxu0 0
        %917 = vmatpush2.bf16.msra.mxu0 0
        %918 = vmatprep.subr.bf16.mxu0 0
        %919 = vmatpush2.bf16.msra.mxu0 0
        %920 = vmatprep.subr.bf16.mxu0 0
        %921 = vmatpush2.bf16.msra.mxu0 0
        %922 = vmatprep.subr.bf16.mxu0 0
        %923 = vmatpush2.bf16.msra.mxu0 0
        %924 = vmatprep.subr.bf16.mxu0 0
        %925 = vmatpush2.bf16.msra.mxu0 0
        %926 = vmatprep.subr.bf16.mxu0 0
        %927 = vmatpush2.bf16.msra.mxu0 0
        %928 = vmatprep.subr.bf16.mxu0 0
        %929 = vmatpush2.bf16.msra.mxu0 0
        %930 = vmatprep.mubr.bf16.mxu0 0
        %931 = vmatmul.mubr.bf16.gmra.mxu0 %v809
        %v932 = vpop.f32.mrf.mxu0
        %v933 = vadd.f32 %v848, %v932
        %v934 = vpop.f32.mrf.mxu0
        %v935 = vpop.f32.mrf.mxu0
        %v936 = vadd.f32 %v848, %v935
        %v937 = vpop.f32.mrf.mxu0
        %938 = vmatprep.mubr.bf16.mxu0 0
        %939 = vmatmul.mubr.bf16.gmra.mxu0 %v810
        %v940 = vpop.f32.mrf.mxu0
        %v941 = vadd.f32 %v848, %v940
        %v942 = vpop.f32.mrf.mxu0
        %v943 = vpop.f32.mrf.mxu0
        %v944 = vadd.f32 %v848, %v943
        %v945 = vpop.f32.mrf.mxu0
        %946 = vmatprep.mubr.bf16.mxu0 0
        %947 = vmatmul.mubr.bf16.gmra.mxu0 %v811
        %v948 = vpop.f32.mrf.mxu0
        %v949 = vadd.f32 %v848, %v948
        %v950 = vpop.f32.mrf.mxu0
        %v951 = vpop.f32.mrf.mxu0
        %v952 = vadd.f32 %v848, %v951
        %v953 = vpop.f32.mrf.mxu0
        %954 = vmatprep.mubr.bf16.mxu0 0
        %955 = vmatmul.mubr.bf16.gmra.mxu0 %v812
        %v956 = vpop.f32.mrf.mxu0
        %v957 = vadd.f32 %v848, %v956
        %v958 = vpop.f32.mrf.mxu0
        %v959 = vpop.f32.mrf.mxu0
        %v960 = vadd.f32 %v848, %v959
        %v961 = vpop.f32.mrf.mxu0
        %962 = vmatprep.mubr.bf16.mxu0 0
        %963 = vmatmul.mubr.bf16.gmra.mxu0 %v813
        %v964 = vpop.f32.mrf.mxu0
        %v965 = vadd.f32 %v848, %v964
        %v966 = vpop.f32.mrf.mxu0
        %v967 = vpop.f32.mrf.mxu0
        %v968 = vadd.f32 %v848, %v967
        %v969 = vpop.f32.mrf.mxu0
        %970 = vmatprep.mubr.bf16.mxu0 0
        %971 = vmatmul.mubr.bf16.gmra.mxu0 %v814
        %v972 = vpop.f32.mrf.mxu0
        %v973 = vadd.f32 %v848, %v972
        %v974 = vpop.f32.mrf.mxu0
        %v975 = vpop.f32.mrf.mxu0
        %v976 = vadd.f32 %v848, %v975
        %v977 = vpop.f32.mrf.mxu0
        %978 = vmatprep.mubr.bf16.mxu0 0
        %979 = vmatmul.mubr.bf16.gmra.mxu0 %v815
        %v980 = vpop.f32.mrf.mxu0
        %v981 = vadd.f32 %v848, %v980
        %v982 = vpop.f32.mrf.mxu0
        %v983 = vpop.f32.mrf.mxu0
        %v984 = vadd.f32 %v848, %v983
        %v985 = vpop.f32.mrf.mxu0
        %986 = vmatprep.mubr.bf16.mxu0 0
        %987 = vmatmul.mubr.bf16.gmra.mxu0 %v816
        %v988 = vpop.f32.mrf.mxu0
        %v989 = vadd.f32 %v848, %v988
        %v990 = vpop.f32.mrf.mxu0
        %v991 = vpop.f32.mrf.mxu0
        %v992 = vadd.f32 %v848, %v991
        %v993 = vpop.f32.mrf.mxu0
        %994 = vmatprep.mubr.bf16.mxu0 0
        %995 = vmatmul.mubr.bf16.gmra.mxu0 %v817
        %v996 = vpop.f32.mrf.mxu0
        %v997 = vadd.f32 %v848, %v996
        %v998 = vpop.f32.mrf.mxu0
        %v999 = vpop.f32.mrf.mxu0
        %v1000 = vadd.f32 %v848, %v999
        %v1001 = vpop.f32.mrf.mxu0
        %1002 = vmatprep.mubr.bf16.mxu0 0
        %1003 = vmatmul.mubr.bf16.gmra.mxu0 %v818
        %v1004 = vpop.f32.mrf.mxu0
        %v1005 = vadd.f32 %v848, %v1004
        %v1006 = vpop.f32.mrf.mxu0
        %v1007 = vpop.f32.mrf.mxu0
        %v1008 = vadd.f32 %v848, %v1007
        %v1009 = vpop.f32.mrf.mxu0
        %1010 = vmatprep.mubr.bf16.mxu0 0
        %1011 = vmatmul.mubr.bf16.gmra.mxu0 %v819
        %v1012 = vpop.f32.mrf.mxu0
        %v1013 = vadd.f32 %v848, %v1012
        %v1014 = vpop.f32.mrf.mxu0
        %v1015 = vpop.f32.mrf.mxu0
        %v1016 = vadd.f32 %v848, %v1015
        %v1017 = vpop.f32.mrf.mxu0
        %1018 = vmatprep.mubr.bf16.mxu0 0
        %1019 = vmatmul.mubr.bf16.gmra.mxu0 %v820
        %v1020 = vpop.f32.mrf.mxu0
        %v1021 = vadd.f32 %v848, %v1020
        %v1022 = vpop.f32.mrf.mxu0
        %v1023 = vpop.f32.mrf.mxu0
        %v1024 = vadd.f32 %v848, %v1023
        %v1025 = vpop.f32.mrf.mxu0
        %1026 = vmatprep.mubr.bf16.mxu0 0
        %1027 = vmatmul.mubr.bf16.gmra.mxu0 %v821
        %v1028 = vpop.f32.mrf.mxu0
        %v1029 = vadd.f32 %v848, %v1028
        %v1030 = vpop.f32.mrf.mxu0
        %v1031 = vpop.f32.mrf.mxu0
        %v1032 = vadd.f32 %v848, %v1031
        %v1033 = vpop.f32.mrf.mxu0
        %1034 = vmatprep.mubr.bf16.mxu0 0
        %1035 = vmatmul.mubr.bf16.gmra.mxu0 %v822
        %v1036 = vpop.f32.mrf.mxu0
        %v1037 = vadd.f32 %v848, %v1036
        %v1038 = vpop.f32.mrf.mxu0
        %v1039 = vpop.f32.mrf.mxu0
        %v1040 = vadd.f32 %v848, %v1039
        %v1041 = vpop.f32.mrf.mxu0
        %1042 = vmatprep.mubr.bf16.mxu0 0
        %1043 = vmatmul.mubr.bf16.gmra.mxu0 %v823
        %v1044 = vpop.f32.mrf.mxu0
        %v1045 = vadd.f32 %v848, %v1044
        %v1046 = vpop.f32.mrf.mxu0
        %v1047 = vpop.f32.mrf.mxu0
        %v1048 = vadd.f32 %v848, %v1047
        %v1049 = vpop.f32.mrf.mxu0
        %1050 = vmatprep.mubr.bf16.mxu0 0
        %1051 = vmatmul.mubr.bf16.gmra.mxu0 %v824
        %v1052 = vpop.f32.mrf.mxu0
        %v1053 = vadd.f32 %v848, %v1052
        %v1054 = vpop.f32.mrf.mxu0
        %v1055 = vpop.f32.mrf.mxu0
        %v1056 = vadd.f32 %v848, %v1055
        %v1057 = vpop.f32.mrf.mxu0
        %1058 = vdwg.mxu0
        %v1059 = vmax.f32 %v933, 0.0
        %v1060 = vmax.f32 %v936, 0.0
        %v1061 = vmax.f32 %v941, 0.0
        %v1062 = vmax.f32 %v944, 0.0
        %v1063 = vmax.f32 %v949, 0.0
        %v1064 = vmax.f32 %v952, 0.0
        %v1065 = vmax.f32 %v957, 0.0
        %v1066 = vmax.f32 %v960, 0.0
        %v1067 = vmax.f32 %v965, 0.0
        %v1068 = vmax.f32 %v968, 0.0
        %v1069 = vmax.f32 %v973, 0.0
        %v1070 = vmax.f32 %v976, 0.0
        %v1071 = vmax.f32 %v981, 0.0
        %v1072 = vmax.f32 %v984, 0.0
        %v1073 = vmax.f32 %v989, 0.0
        %v1074 = vmax.f32 %v992, 0.0
        %v1075 = vmax.f32 %v997, 0.0
        %v1076 = vmax.f32 %v1000, 0.0
        %v1077 = vmax.f32 %v1005, 0.0
        %v1078 = vmax.f32 %v1008, 0.0
        %v1079 = vmax.f32 %v1013, 0.0
        %v1080 = vmax.f32 %v1016, 0.0
        %v1081 = vmax.f32 %v1021, 0.0
        %v1082 = vmax.f32 %v1024, 0.0
        %v1083 = vmax.f32 %v1029, 0.0
        %v1084 = vmax.f32 %v1032, 0.0
        %v1085 = vmax.f32 %v1037, 0.0
        %v1086 = vmax.f32 %v1040, 0.0
        %v1087 = vmax.f32 %v1045, 0.0
        %v1088 = vmax.f32 %v1048, 0.0
        %v1089 = vmax.f32 %v1053, 0.0
        %v1090 = vmax.f32 %v1056, 0.0
        %1091 = vst [vmem:[%s218] sm:$0xff] %v1059
        %1092 = vst [vmem:[%s218 + $0x8] sm:$0xff] %v1060
        %1093 = vst [vmem:[%s218 + $0x10] sm:$0xff] %v1061
        %1094 = vst [vmem:[%s218 + $0x18] sm:$0xff] %v1062
        %1095 = vst [vmem:[%s218 + $0x20] sm:$0xff] %v1063
        %1096 = vst [vmem:[%s218 + $0x28] sm:$0xff] %v1064
        %1097 = vst [vmem:[%s218 + $0x30] sm:$0xff] %v1065
        %1098 = vst [vmem:[%s218 + $0x38] sm:$0xff] %v1066
        %1099 = vst [vmem:[%s218 + $0x40] sm:$0xff] %v1067
        %1100 = vst [vmem:[%s218 + $0x48] sm:$0xff] %v1068
        %1101 = vst [vmem:[%s218 + $0x50] sm:$0xff] %v1069
        %1102 = vst [vmem:[%s218 + $0x58] sm:$0xff] %v1070
        %1103 = vst [vmem:[%s218 + $0x60] sm:$0xff] %v1071
        %1104 = vst [vmem:[%s218 + $0x68] sm:$0xff] %v1072
        %1105 = vst [vmem:[%s218 + $0x70] sm:$0xff] %v1073
        %1106 = vst [vmem:[%s218 + $0x78] sm:$0xff] %v1074
        %1107 = vst [vmem:[%s218 + $0x80] sm:$0xff] %v1075
        %1108 = vst [vmem:[%s218 + $0x88] sm:$0xff] %v1076
        %1109 = vst [vmem:[%s218 + $0x90] sm:$0xff] %v1077
        %1110 = vst [vmem:[%s218 + $0x98] sm:$0xff] %v1078
        %1111 = vst [vmem:[%s218 + $0xa0] sm:$0xff] %v1079
        %1112 = vst [vmem:[%s218 + $0xa8] sm:$0xff] %v1080
        %1113 = vst [vmem:[%s218 + $0xb0] sm:$0xff] %v1081
        %1114 = vst [vmem:[%s218 + $0xb8] sm:$0xff] %v1082
        %1115 = vst [vmem:[%s218 + $0xc0] sm:$0xff] %v1083
        %1116 = vst [vmem:[%s218 + $0xc8] sm:$0xff] %v1084
        %1117 = vst [vmem:[%s218 + $0xd0] sm:$0xff] %v1085
        %1118 = vst [vmem:[%s218 + $0xd8] sm:$0xff] %v1086
        %1119 = vst [vmem:[%s218 + $0xe0] sm:$0xff] %v1087
        %1120 = vst [vmem:[%s218 + $0xe8] sm:$0xff] %v1088
        %1121 = vst [vmem:[%s218 + $0xf0] sm:$0xff] %v1089
        %1122 = vst [vmem:[%s218 + $0xf8] sm:$0xff] %v1090
        %s1123 = sand.u32 %s137, 1
        %s1124 = scalar_lea.sflag [#allocation3], %s1123
        %s1125 = sand.u32 %s137, 1
        %s1126 = smul.addr %s1125, 256
        %s1127 = scalar_lea.vmem [#allocation2], %s1126
        // Predicated region
        $region41: #{_forward_impl.1} parent=39 // pred_check
          %p1128 = pneg %p147
        $region42: #{_forward_impl.1} parent=39 // pred_check_branch
          %1130 = sbr.rel (%p1128) target = $region44
        $region43: #{_forward_impl.1} parent=39 // pred_region
          %s1131 = smul.u32 32, %s19
          %s1133 = ssub.s32 4096, 4096
          %1134 = vsyncadd %s1124, %s1133
          %s1135 = smul.addr %s1131, 128
          %s1136 = scalar_lea.hbm %s5, %s1135
          %s1137 = sshll.u32 %s1127, 4
          %s1138 = int_to_ptr.vmem [resolvable:$true] %s1137
          %1143 = dma.vmem_to_hbm [thread:$0]  %s1138, 4096, %s1136, %s1124, 128, 128, 8
        $region44: #{_forward_impl.1} parent=39 // pred_fallthru
          _
      $region40: #{_forward_impl.1} parent=5 // pred_fallthru
        _
      %p1144 = scmp.le.s32.totalorder 2, %s14
      // Predicated region
      $region45: #{_forward_impl.1} parent=5 // pred_check
        %p1145 = pneg %p1144
      $region46: #{_forward_impl.1} parent=5 // pred_check_branch
        %1147 = sbr.rel (%p1145) target = $region48
      $region47: #{_forward_impl.1} parent=5 // pred_region
        %s1148 = ssub.s32 %s14, 2
        // Predicated region
        $region49: #{_forward_impl.1} parent=47 // pred_check
          %p1149 = pneg %p153
        $region50: #{_forward_impl.1} parent=47 // pred_check_branch
          %1151 = sbr.rel (%p1149) target = $region52
        $region51: #{_forward_impl.1} parent=47 // pred_region
          %s1152 = sand.u32 %s138, 1
          %s1153 = scalar_lea.sflag [#allocation3], %s1152
          %s1154 = sand.u32 %s138, 1
          %s1155 = smul.addr %s1154, 256
          %s1156 = scalar_lea.vmem [#allocation2], %s1155
          %1157 = dma.done %s1153, 4096
        $region52: #{_forward_impl.1} parent=47 // pred_fallthru
          _
      $region48: #{_forward_impl.1} parent=5 // pred_fallthru
        _
    $region6: #{_forward_impl.1} parent=1 // loop_footer
      %s18 = sadd.s32 1, %s14
    $region7: #{_forward_impl.1} parent=1 // loop_footer_branch
      %13 = sbr.rel target = $region3
    $region8: #{_forward_impl.1} parent=1 // loop_exit
      _
    %1158 = vsyncpa [#allocation3], 1
    %s1159 = scalar_lea.sflag [#allocation3], 1
    %1160 = vsyncpa %s1159, 1

// kernel: _forward_impl.1
$region0: #{_forward_impl.1}
  #allocation0 [shape = 'u32[]', space=smem, size = 0x4, offset = 0x4, fixed_abs, tag = 'smem constant byte address 0x4 - core index']
  #allocation1 [shape = 'u32[144,128]{1,0:T(1,128)}', space=vmem, size = 0x12000, scoped, tag = 'internal scratch']
  %s0 = inlined_call_operand.vmem [shape: f32[512,1], index: 0, kind: input, shape index: {}]
  %s1 = inlined_call_operand.vmem [shape: f32[1,128], index: 1, kind: input, shape index: {}]
  %s2 = inlined_call_operand.vmem [shape: f32[1,128], index: 2, kind: input, shape index: {}]
  %s3 = inlined_call_operand.vmem [shape: bf16[2,128,128], index: 3, kind: input, shape index: {}]
  %s4 = inlined_call_operand.vmem [shape: f32[2,1,128], index: 4, kind: input, shape index: {}]
  %s5 = inlined_call_operand.hbm [shape: f32[512,128], index: 5, kind: output, shape index: {}]
  %s6 = sld [smem:[#allocation0]]
  $region53: #{_forward_impl.1} parent=0
    _
  %s8 = ssub.s32 1, %s6
  %s9 = scalar_select 0, %s8, %s6
  $region1: #{_forward_impl.1} parent=0
    #allocation2 [shape = 'u8[262144]{0}', space=vmem, size = 0x40000, scoped, tag = 'output window, operand 0']
    #allocation3 [shape = 's32[2]{0}', space=sflag, size = 0x8, scoped, tag = 'scoped memory for _forward_impl.1']
    %10 = vsyncpa [#allocation3], 0
    %s11 = scalar_lea.sflag [#allocation3], 1
    %12 = vsyncpa %s11, 0
    loop: start=0, step=1, limit=4
    $region2: #{_forward_impl.1} parent=1 // loop_pre_header
      _
    $region3: #{_forward_impl.1} parent=1 // loop_header
      %s14 = sphi 0, %s18
      %p15 = scmp.ge.s32.totalorder %s14, 4
      %s24 = sphi 0, %s26
      %s27 = sphi 0, %s24
      %s28 = sphi 0, %s27
      %s44 = sphi 0, %s28
      %s48 = sphi 0, %s48
      %s50 = sphi 0, %s48
      %s51 = sphi 0, %s50
      %s65 = sphi 0, %s51
      %s69 = sphi 0, %s69
      %s71 = sphi 0, %s69
      %s72 = sphi 0, %s71
      %s86 = sphi 0, %s72
      %s90 = sphi 0, %s90
      %s92 = sphi 0, %s90
      %s93 = sphi 0, %s92
      %s107 = sphi 0, %s93
      %s111 = sphi 0, %s111
      %s113 = sphi 0, %s111
      %s114 = sphi 0, %s113
      %s128 = sphi 0, %s114
      %s134 = sphi 0, %s136
      %s137 = sphi 0, %s134
      %s138 = sphi 0, %s137
      %s154 = sphi 0, %s138
    $region4: #{_forward_impl.1} parent=1 // loop_header_branch
      %17 = sbr.rel (%p15) target = $region8
    $region5: #{_forward_impl.1} parent=1 // loop_body
      %s19 = ssub.s32 %s14, 1
      %s20 = ssub.s32 %s14, 2
      %s21 = sadd.s32 %s14, 1
      %s22 = ssub.s32 %s14, %s21
      %p23 = scmp.eq.s32.totalorder %s22, 0
      %s25 = sadd.s32 %s24, 1
      %s26 = scalar_select %p23, %s24, %s25
      %p29 = pneg %p23
      %p30 = scmp.eq.s32.totalorder %s14, 1
      %p31 = por %p29, %p30
      %p32 = scmp.ne.s32.totalorder %s24, %s27
      %p33 = scmp.eq.s32.totalorder %s14, 0
      %p34 = por %p32, %p33
      %p35 = scmp.ne.s32.totalorder %s24, %s27
      %p36 = scmp.eq.s32.totalorder %s19, 1
      %p37 = por %p35, %p36
      %p38 = scmp.ne.s32.totalorder %s27, %s28
      %p39 = scmp.eq.s32.totalorder %s19, 0
      %p40 = por %p38, %p39
      %p41 = scmp.ne.s32.totalorder %s27, %s28
      %p42 = scmp.eq.s32.totalorder %s20, 1
      %p43 = por %p41, %p42
      %p45 = scmp.ne.s32.totalorder %s28, %s44
      %p46 = scmp.eq.s32.totalorder %s20, 0
      %p47 = por %p45, %p46
      %s49 = sadd.s32 %s48, 1
      %p52 = scmp.eq.s32.totalorder %s14, 1
      %p53 = scmp.ne.s32.totalorder %s48, %s50
      %p54 = scmp.eq.s32.totalorder %s14, 0
      %p55 = por %p53, %p54
      %p56 = scmp.ne.s32.totalorder %s48, %s50
      %p57 = scmp.eq.s32.totalorder %s19, 1
      %p58 = por %p56, %p57
      %p59 = scmp.ne.s32.totalorder %s50, %s51
      %p60 = scmp.eq.s32.totalorder %s19, 0
      %p61 = por %p59, %p60
      %p62 = scmp.ne.s32.totalorder %s50, %s51
      %p63 = scmp.eq.s32.totalorder %s20, 1
      %p64 = por %p62, %p63
      %p66 = scmp.ne.s32.totalorder %s51, %s65
      %p67 = scmp.eq.s32.totalorder %s20, 0
      %p68 = por %p66, %p67
      %s70 = sadd.s32 %s69, 1
      %p73 = scmp.eq.s32.totalorder %s14, 1
      %p74 = scmp.ne.s32.totalorder %s69, %s71
      %p75 = scmp.eq.s32.totalorder %s14, 0
      %p76 = por %p74, %p75
      %p77 = scmp.ne.s32.totalorder %s69, %s71
      %p78 = scmp.eq.s32.totalorder %s19, 1
      %p79 = por %p77, %p78
      %p80 = scmp.ne.s32.totalorder %s71, %s72
      %p81 = scmp.eq.s32.totalorder %s19, 0
      %p82 = por %p80, %p81
      %p83 = scmp.ne.s32.totalorder %s71, %s72
      %p84 = scmp.eq.s32.totalorder %s20, 1
      %p85 = por %p83, %p84
      %p87 = scmp.ne.s32.totalorder %s72, %s86
      %p88 = scmp.eq.s32.totalorder %s20, 0
      %p89 = por %p87, %p88
      %s91 = sadd.s32 %s90, 1
      %p94 = scmp.eq.s32.totalorder %s14, 1
      %p95 = scmp.ne.s32.totalorder %s90, %s92
      %p96 = scmp.eq.s32.totalorder %s14, 0
      %p97 = por %p95, %p96
      %p98 = scmp.ne.s32.totalorder %s90, %s92
      %p99 = scmp.eq.s32.totalorder %s19, 1
      %p100 = por %p98, %p99
      %p101 = scmp.ne.s32.totalorder %s92, %s93
      %p102 = scmp.eq.s32.totalorder %s19, 0
      %p103 = por %p101, %p102
      %p104 = scmp.ne.s32.totalorder %s92, %s93
      %p105 = scmp.eq.s32.totalorder %s20, 1
      %p106 = por %p104, %p105
      %p108 = scmp.ne.s32.totalorder %s93, %s107
      %p109 = scmp.eq.s32.totalorder %s20, 0
      %p110 = por %p108, %p109
      %s112 = sadd.s32 %s111, 1
      %p115 = scmp.eq.s32.totalorder %s14, 1
      %p116 = scmp.ne.s32.totalorder %s111, %s113
      %p117 = scmp.eq.s32.totalorder %s14, 0
      %p118 = por %p116, %p117
      %p119 = scmp.ne.s32.totalorder %s111, %s113
      %p120 = scmp.eq.s32.totalorder %s19, 1
      %p121 = por %p119, %p120
      %p122 = scmp.ne.s32.totalorder %s113, %s114
      %p123 = scmp.eq.s32.totalorder %s19, 0
      %p124 = por %p122, %p123
      %p125 = scmp.ne.s32.totalorder %s113, %s114
      %p126 = scmp.eq.s32.totalorder %s20, 1
      %p127 = por %p125, %p126
      %p129 = scmp.ne.s32.totalorder %s114, %s128
      %p130 = scmp.eq.s32.totalorder %s20, 0
      %p131 = por %p129, %p130
      %s132 = ssub.s32 %s14, %s21
      %p133 = scmp.eq.s32.totalorder %s132, 0
      %s135 = sadd.s32 %s134, 1
      %s136 = scalar_select %p133, %s134, %s135
      %p139 = pneg %p133
      %p140 = scmp.eq.s32.totalorder %s14, 1
      %p141 = por %p139, %p140
      %p142 = scmp.ne.s32.totalorder %s134, %s137
      %p143 = scmp.eq.s32.totalorder %s14, 0
      %p144 = por %p142, %p143
      %p145 = scmp.ne.s32.totalorder %s134, %s137
      %p146 = scmp.eq.s32.totalorder %s19, 1
      %p147 = por %p145, %p146
      %p148 = scmp.ne.s32.totalorder %s137, %s138
      %p149 = scmp.eq.s32.totalorder %s19, 0
      %p150 = por %p148, %p149
      %p151 = scmp.ne.s32.totalorder %s137, %s138
      %p152 = scmp.eq.s32.totalorder %s20, 1
      %p153 = por %p151, %p152
      %p155 = scmp.ne.s32.totalorder %s138, %s154
      %p156 = scmp.eq.s32.totalorder %s20, 0
      %p157 = por %p155, %p156
      %p158 = scmp.le.s32.totalorder 1, %s14
      %p159 = scmp.lt.s32.totalorder %s14, 3
      %p160 = pnand %p158, %p159
      %p161 = pneg %p160
      // Predicated region
      $region9: #{_forward_impl.1} parent=5 // pred_check
        _
      $region10: #{_forward_impl.1} parent=5 // pred_check_branch
        %163 = sbr.rel (%p160) target = $region12
      $region11: #{_forward_impl.1} parent=5 // pred_region
        %s164 = ssub.s32 %s14, 1
        // Predicated region
        $region13: #{_forward_impl.1} parent=11 // pred_check
          %p165 = pneg %p61
        $region14: #{_forward_impl.1} parent=11 // pred_check_branch
          %167 = sbr.rel (%p165) target = $region16
        $region15: #{_forward_impl.1} parent=11 // pred_region
          _
        $region16: #{_forward_impl.1} parent=11 // pred_fallthru
          _
        // Predicated region
        $region17: #{_forward_impl.1} parent=11 // pred_check
          %p168 = pneg %p82
        $region18: #{_forward_impl.1} parent=11 // pred_check_branch
          %170 = sbr.rel (%p168) target = $region20
        $region19: #{_forward_impl.1} parent=11 // pred_region
          _
        $region20: #{_forward_impl.1} parent=11 // pred_fallthru
          _
        // Predicated region
        $region21: #{_forward_impl.1} parent=11 // pred_check
          %p171 = pneg %p103
        $region22: #{_forward_impl.1} parent=11 // pred_check_branch
          %173 = sbr.rel (%p171) target = $region24
        $region23: #{_forward_impl.1} parent=11 // pred_region
          _
        $region24: #{_forward_impl.1} parent=11 // pred_fallthru
          _
        // Predicated region
        $region25: #{_forward_impl.1} parent=11 // pred_check
          %p174 = pneg %p124
        $region26: #{_forward_impl.1} parent=11 // pred_check_branch
          %176 = sbr.rel (%p174) target = $region28
        $region27: #{_forward_impl.1} parent=11 // pred_region
          _
        $region28: #{_forward_impl.1} parent=11 // pred_fallthru
          _
      $region12: #{_forward_impl.1} parent=5 // pred_fallthru
        _
      %p177 = scmp.lt.s32.totalorder %s14, 2
      // Predicated region
      $region29: #{_forward_impl.1} parent=5 // pred_check
        %p178 = pneg %p177
      $region30: #{_forward_impl.1} parent=5 // pred_check_branch
        %180 = sbr.rel (%p178) target = $region32
      $region31: #{_forward_impl.1} parent=5 // pred_region
        // Predicated region
        $region33: #{_forward_impl.1} parent=31 // pred_check
          %p181 = pneg %p34
        $region34: #{_forward_impl.1} parent=31 // pred_check_branch
          %183 = sbr.rel (%p181) target = $region36
        $region35: #{_forward_impl.1} parent=31 // pred_region
          %s184 = smul.u32 32, %s14
          %p185 = scmp.lt.s32.totalorder %s184, 63
          %s186 = scalar_select %p185, %s184, 63
          %s187 = smul.addr %s186, 8
          %s188 = scalar_lea.vmem %s0, %s187
          %s189 = smul.u32 32, %s14
        $region36: #{_forward_impl.1} parent=31 // pred_fallthru
          _
      $region32: #{_forward_impl.1} parent=5 // pred_fallthru
        _
      %p190 = scmp.le.s32.totalorder 1, %s14
      %p191 = scmp.lt.s32.totalorder %s14, 3
      %p192 = pnand %p190, %p191
      %p193 = pneg %p192
      // Predicated region
      $region37: #{_forward_impl.1} parent=5 // pred_check
        _
      $region38: #{_forward_impl.1} parent=5 // pred_check_branch
        %195 = sbr.rel (%p192) target = $region40
      $region39: #{_forward_impl.1} parent=5 // pred_region
        %s196 = ssub.s32 %s14, 1
        %s197 = smul.u32 32, %s19
        %p198 = scmp.lt.s32.totalorder %s197, 63
        %s199 = scalar_select %p198, %s197, 63
        %s200 = smul.addr %s199, 8
        %s201 = scalar_lea.vmem %s0, %s200
        %p202 = pneg %p40
        %p203 = pneg %p37
        %p204 = pneg %p61
        %p205 = pneg %p58
        %p206 = pneg %p82
        %p207 = pneg %p79
        %p208 = pneg %p103
        %p209 = pneg %p100
        %p210 = pneg %p124
        %p211 = pneg %p121
        %p212 = pneg %p150
        %p213 = pneg %p147
        %s214 = sand.u32 %s137, 1
        %s215 = scalar_lea.sflag [#allocation3], %s214
        %s216 = sand.u32 %s137, 1
        %s217 = smul.addr %s216, 256
        %s218 = scalar_lea.vmem [#allocation2], %s217
        %s219 = smul.u32 32, %s19
        %p220 = scmp.lt.s32.totalorder %s219, 63
        %s221 = scalar_select %p220, %s219, 63
        %s222 = smul.addr %s221, 8
        %s223 = scalar_lea.vmem %s0, %s222
        %s224 = smul.u32 32, %s19
        %s225 = smul.u32 32, %s19
        %v227 = vld [vmem:[%s223] sm:$0xff]
        %v228 = vld [vmem:[%s223 + $0x8] sm:$0xff]
        %v229 = vld [vmem:[%s223 + $0x10] sm:$0xff]
        %v230 = vld [vmem:[%s223 + $0x18] sm:$0xff]
        %v231 = vld [vmem:[%s223 + $0x20] sm:$0xff]
        %v232 = vld [vmem:[%s223 + $0x28] sm:$0xff]
        %v233 = vld [vmem:[%s223 + $0x30] sm:$0xff]
        %v234 = vld [vmem:[%s223 + $0x38] sm:$0xff]
        %v235 = vld [vmem:[%s223 + $0x40] sm:$0xff]
        %v236 = vld [vmem:[%s223 + $0x48] sm:$0xff]
        %v237 = vld [vmem:[%s223 + $0x50] sm:$0xff]
        %v238 = vld [vmem:[%s223 + $0x58] sm:$0xff]
        %v239 = vld [vmem:[%s223 + $0x60] sm:$0xff]
        %v240 = vld [vmem:[%s223 + $0x68] sm:$0xff]
        %v241 = vld [vmem:[%s223 + $0x70] sm:$0xff]
        %v242 = vld [vmem:[%s223 + $0x78] sm:$0xff]
        %v243 = vld [vmem:[%s223 + $0x80] sm:$0xff]
        %v244 = vld [vmem:[%s223 + $0x88] sm:$0xff]
        %v245 = vld [vmem:[%s223 + $0x90] sm:$0xff]
        %v246 = vld [vmem:[%s223 + $0x98] sm:$0xff]
        %v247 = vld [vmem:[%s223 + $0xa0] sm:$0xff]
        %v248 = vld [vmem:[%s223 + $0xa8] sm:$0xff]
        %v249 = vld [vmem:[%s223 + $0xb0] sm:$0xff]
        %v250 = vld [vmem:[%s223 + $0xb8] sm:$0xff]
        %v251 = vld [vmem:[%s223 + $0xc0] sm:$0xff]
        %v252 = vld [vmem:[%s223 + $0xc8] sm:$0xff]
        %v253 = vld [vmem:[%s223 + $0xd0] sm:$0xff]
        %v254 = vld [vmem:[%s223 + $0xd8] sm:$0xff]
        %v255 = vld [vmem:[%s223 + $0xe0] sm:$0xff]
        %v256 = vld [vmem:[%s223 + $0xe8] sm:$0xff]
        %v257 = vld [vmem:[%s223 + $0xf0] sm:$0xff]
        %v258 = vld [vmem:[%s223 + $0xf8] sm:$0xff]
        %v259 = vld [vmem:[%s1] sm:$0x1]
        %261 = vset.pattern.permute.xlu0 0
        %262 = vperm.xlu0 %261, %v227
        %v263 = vpop.permute.xlu0 %262
        %266 = vset.pattern.permute.xlu0 0
        %267 = vperm.xlu0 %266, %v228
        %v268 = vpop.permute.xlu0 %267
        %271 = vset.pattern.permute.xlu0 0
        %272 = vperm.xlu0 %271, %v229
        %v273 = vpop.permute.xlu0 %272
        %276 = vset.pattern.permute.xlu0 0
        %277 = vperm.xlu0 %276, %v230
        %v278 = vpop.permute.xlu0 %277
        %281 = vset.pattern.permute.xlu0 0
        %282 = vperm.xlu0 %281, %v231
        %v283 = vpop.permute.xlu0 %282
        %286 = vset.pattern.permute.xlu0 0
        %287 = vperm.xlu0 %286, %v232
        %v288 = vpop.permute.xlu0 %287
        %291 = vset.pattern.permute.xlu0 0
        %292 = vperm.xlu0 %291, %v233
        %v293 = vpop.permute.xlu0 %292
        %296 = vset.pattern.permute.xlu0 0
        %297 = vperm.xlu0 %296, %v234
        %v298 = vpop.permute.xlu0 %297
        %301 = vset.pattern.permute.xlu0 0
        %302 = vperm.xlu0 %301, %v235
        %v303 = vpop.permute.xlu0 %302
        %306 = vset.pattern.permute.xlu0 0
        %307 = vperm.xlu0 %306, %v236
        %v308 = vpop.permute.xlu0 %307
        %311 = vset.pattern.permute.xlu0 0
        %312 = vperm.xlu0 %311, %v237
        %v313 = vpop.permute.xlu0 %312
        %316 = vset.pattern.permute.xlu0 0
        %317 = vperm.xlu0 %316, %v238
        %v318 = vpop.permute.xlu0 %317
        %321 = vset.pattern.permute.xlu0 0
        %322 = vperm.xlu0 %321, %v239
        %v323 = vpop.permute.xlu0 %322
        %326 = vset.pattern.permute.xlu0 0
        %327 = vperm.xlu0 %326, %v240
        %v328 = vpop.permute.xlu0 %327
        %331 = vset.pattern.permute.xlu0 0
        %332 = vperm.xlu0 %331, %v241
        %v333 = vpop.permute.xlu0 %332
        %336 = vset.pattern.permute.xlu0 0
        %337 = vperm.xlu0 %336, %v242
        %v338 = vpop.permute.xlu0 %337
        %341 = vset.pattern.permute.xlu0 0
        %342 = vperm.xlu0 %341, %v243
        %v343 = vpop.permute.xlu0 %342
        %346 = vset.pattern.permute.xlu0 0
        %347 = vperm.xlu0 %346, %v244
        %v348 = vpop.permute.xlu0 %347
        %351 = vset.pattern.permute.xlu0 0
        %352 = vperm.xlu0 %351, %v245
        %v353 = vpop.permute.xlu0 %352
        %356 = vset.pattern.permute.xlu0 0
        %357 = vperm.xlu0 %356, %v246
        %v358 = vpop.permute.xlu0 %357
        %361 = vset.pattern.permute.xlu0 0
        %362 = vperm.xlu0 %361, %v247
        %v363 = vpop.permute.xlu0 %362
        %366 = vset.pattern.permute.xlu0 0
        %367 = vperm.xlu0 %366, %v248
        %v368 = vpop.permute.xlu0 %367
        %371 = vset.pattern.permute.xlu0 0
        %372 = vperm.xlu0 %371, %v249
        %v373 = vpop.permute.xlu0 %372
        %376 = vset.pattern.permute.xlu0 0
        %377 = vperm.xlu0 %376, %v250
        %v378 = vpop.permute.xlu0 %377
        %381 = vset.pattern.permute.xlu0 0
        %382 = vperm.xlu0 %381, %v251
        %v383 = vpop.permute.xlu0 %382
        %386 = vset.pattern.permute.xlu0 0
        %387 = vperm.xlu0 %386, %v252
        %v388 = vpop.permute.xlu0 %387
        %391 = vset.pattern.permute.xlu0 0
        %392 = vperm.xlu0 %391, %v253
        %v393 = vpop.permute.xlu0 %392
        %396 = vset.pattern.permute.xlu0 0
        %397 = vperm.xlu0 %396, %v254
        %v398 = vpop.permute.xlu0 %397
        %401 = vset.pattern.permute.xlu0 0
        %402 = vperm.xlu0 %401, %v255
        %v403 = vpop.permute.xlu0 %402
        %406 = vset.pattern.permute.xlu0 0
        %407 = vperm.xlu0 %406, %v256
        %v408 = vpop.permute.xlu0 %407
        %411 = vset.pattern.permute.xlu0 0
        %412 = vperm.xlu0 %411, %v257
        %v413 = vpop.permute.xlu0 %412
        %416 = vset.pattern.permute.xlu0 0
        %417 = vperm.xlu0 %416, %v258
        %v418 = vpop.permute.xlu0 %417
        %v421 = vlaneseq
        %v422 = vshrl.u32 %v421, 7
        %v423 = vsub.s32 0, %v422
        %v424 = vrot.slane %v259, %v423
        %v426 = vmul.f32 %v263, %v424
        %v427 = vmul.f32 %v268, %v424
        %v428 = vmul.f32 %v273, %v424
        %v429 = vmul.f32 %v278, %v424
        %v430 = vmul.f32 %v283, %v424
        %v431 = vmul.f32 %v288, %v424
        %v432 = vmul.f32 %v293, %v424
        %v433 = vmul.f32 %v298, %v424
        %v434 = vmul.f32 %v303, %v424
        %v435 = vmul.f32 %v308, %v424
        %v436 = vmul.f32 %v313, %v424
        %v437 = vmul.f32 %v318, %v424
        %v438 = vmul.f32 %v323, %v424
        %v439 = vmul.f32 %v328, %v424
        %v440 = vmul.f32 %v333, %v424
        %v441 = vmul.f32 %v338, %v424
        %v442 = vmul.f32 %v343, %v424
        %v443 = vmul.f32 %v348, %v424
        %v444 = vmul.f32 %v353, %v424
        %v445 = vmul.f32 %v358, %v424
        %v446 = vmul.f32 %v363, %v424
        %v447 = vmul.f32 %v368, %v424
        %v448 = vmul.f32 %v373, %v424
        %v449 = vmul.f32 %v378, %v424
        %v450 = vmul.f32 %v383, %v424
        %v451 = vmul.f32 %v388, %v424
        %v452 = vmul.f32 %v393, %v424
        %v453 = vmul.f32 %v398, %v424
        %v454 = vmul.f32 %v403, %v424
        %v455 = vmul.f32 %v408, %v424
        %v456 = vmul.f32 %v413, %v424
        %v457 = vmul.f32 %v418, %v424
        %v458 = vld [vmem:[%s2] sm:$0x1]
        %v460 = vlaneseq
        %v461 = vshrl.u32 %v460, 7
        %v462 = vsub.s32 0, %v461
        %v463 = vrot.slane %v458, %v462
        %v465 = vadd.f32 %v426, %v463
        %v466 = vadd.f32 %v427, %v463
        %v467 = vadd.f32 %v428, %v463
        %v468 = vadd.f32 %v429, %v463
        %v469 = vadd.f32 %v430, %v463
        %v470 = vadd.f32 %v431, %v463
        %v471 = vadd.f32 %v432, %v463
        %v472 = vadd.f32 %v433, %v463
        %v473 = vadd.f32 %v434, %v463
        %v474 = vadd.f32 %v435, %v463
        %v475 = vadd.f32 %v436, %v463
        %v476 = vadd.f32 %v437, %v463
        %v477 = vadd.f32 %v438, %v463
        %v478 = vadd.f32 %v439, %v463
        %v479 = vadd.f32 %v440, %v463
        %v480 = vadd.f32 %v441, %v463
        %v481 = vadd.f32 %v442, %v463
        %v482 = vadd.f32 %v443, %v463
        %v483 = vadd.f32 %v444, %v463
        %v484 = vadd.f32 %v445, %v463
        %v485 = vadd.f32 %v446, %v463
        %v486 = vadd.f32 %v447, %v463
        %v487 = vadd.f32 %v448, %v463
        %v488 = vadd.f32 %v449, %v463
        %v489 = vadd.f32 %v450, %v463
        %v490 = vadd.f32 %v451, %v463
        %v491 = vadd.f32 %v452, %v463
        %v492 = vadd.f32 %v453, %v463
        %v493 = vadd.f32 %v454, %v463
        %v494 = vadd.f32 %v455, %v463
        %v495 = vadd.f32 %v456, %v463
        %v496 = vadd.f32 %v457, %v463
        %v497 = vmax.f32 %v465, 0.0
        %v498 = vmax.f32 %v466, 0.0
        %v499 = vmax.f32 %v467, 0.0
        %v500 = vmax.f32 %v468, 0.0
        %v501 = vmax.f32 %v469, 0.0
        %v502 = vmax.f32 %v470, 0.0
        %v503 = vmax.f32 %v471, 0.0
        %v504 = vmax.f32 %v472, 0.0
        %v505 = vmax.f32 %v473, 0.0
        %v506 = vmax.f32 %v474, 0.0
        %v507 = vmax.f32 %v475, 0.0
        %v508 = vmax.f32 %v476, 0.0
        %v509 = vmax.f32 %v477, 0.0
        %v510 = vmax.f32 %v478, 0.0
        %v511 = vmax.f32 %v479, 0.0
        %v512 = vmax.f32 %v480, 0.0
        %v513 = vmax.f32 %v481, 0.0
        %v514 = vmax.f32 %v482, 0.0
        %v515 = vmax.f32 %v483, 0.0
        %v516 = vmax.f32 %v484, 0.0
        %v517 = vmax.f32 %v485, 0.0
        %v518 = vmax.f32 %v486, 0.0
        %v519 = vmax.f32 %v487, 0.0
        %v520 = vmax.f32 %v488, 0.0
        %v521 = vmax.f32 %v489, 0.0
        %v522 = vmax.f32 %v490, 0.0
        %v523 = vmax.f32 %v491, 0.0
        %v524 = vmax.f32 %v492, 0.0
        %v525 = vmax.f32 %v493, 0.0
        %v526 = vmax.f32 %v494, 0.0
        %v527 = vmax.f32 %v495, 0.0
        %v528 = vmax.f32 %v496, 0.0
        %v529 = vpack.c.bf16 %v498, %v497
        %v530 = vpack.c.bf16 %v500, %v499
        %v531 = vpack.c.bf16 %v502, %v501
        %v532 = vpack.c.bf16 %v504, %v503
        %v533 = vpack.c.bf16 %v506, %v505
        %v534 = vpack.c.bf16 %v508, %v507
        %v535 = vpack.c.bf16 %v510, %v509
        %v536 = vpack.c.bf16 %v512, %v511
        %v537 = vpack.c.bf16 %v514, %v513
        %v538 = vpack.c.bf16 %v516, %v515
        %v539 = vpack.c.bf16 %v518, %v517
        %v540 = vpack.c.bf16 %v520, %v519
        %v541 = vpack.c.bf16 %v522, %v521
        %v542 = vpack.c.bf16 %v524, %v523
        %v543 = vpack.c.bf16 %v526, %v525
        %v544 = vpack.c.bf16 %v528, %v527
        %v545 = vld [vmem:[%s3] sm:$0xf]
        %v546 = vld [vmem:[%s3 + $0x4] sm:$0xf]
        %v547 = vld [vmem:[%s3 + $0x8] sm:$0xf]
        %v548 = vld [vmem:[%s3 + $0xc] sm:$0xf]
        %v549 = vld [vmem:[%s3 + $0x10] sm:$0xf]
        %v550 = vld [vmem:[%s3 + $0x14] sm:$0xf]
        %v551 = vld [vmem:[%s3 + $0x18] sm:$0xf]
        %v552 = vld [vmem:[%s3 + $0x1c] sm:$0xf]
        %v553 = vld [vmem:[%s3 + $0x20] sm:$0xf]
        %v554 = vld [vmem:[%s3 + $0x24] sm:$0xf]
        %v555 = vld [vmem:[%s3 + $0x28] sm:$0xf]
        %v556 = vld [vmem:[%s3 + $0x2c] sm:$0xf]
        %v557 = vld [vmem:[%s3 + $0x30] sm:$0xf]
        %v558 = vld [vmem:[%s3 + $0x34] sm:$0xf]
        %v559 = vld [vmem:[%s3 + $0x38] sm:$0xf]
        %v560 = vld [vmem:[%s3 + $0x3c] sm:$0xf]
        %v561 = vld [vmem:[%s4] sm:$0x1]
        %v563 = vlaneseq
        %v564 = vshrl.u32 %v563, 7
        %v565 = vsub.s32 0, %v564
        %v566 = vrot.slane %v561, %v565
        %v584 = vunpack.c.l.b16 %v545
        %v585 = vunpack.c.l.b16 %v546
        %v586 = vunpack.c.l.b16 %v547
        %v587 = vunpack.c.l.b16 %v548
        %v588 = vunpack.c.l.b16 %v549
        %v589 = vunpack.c.l.b16 %v550
        %v590 = vunpack.c.l.b16 %v551
        %v591 = vunpack.c.l.b16 %v552
        %v592 = vunpack.c.l.b16 %v553
        %v593 = vunpack.c.l.b16 %v554
        %v594 = vunpack.c.l.b16 %v555
        %v595 = vunpack.c.l.b16 %v556
        %v596 = vunpack.c.l.b16 %v557
        %v597 = vunpack.c.l.b16 %v558
        %v598 = vunpack.c.l.b16 %v559
        %v599 = vunpack.c.l.b16 %v560
        %v600 = vpack.c.b16 %v585, %v584
        %v601 = vpack.c.b16 %v587, %v586
        %v602 = vpack.c.b16 %v589, %v588
        %v603 = vpack.c.b16 %v591, %v590
        %v604 = vpack.c.b16 %v593, %v592
        %v605 = vpack.c.b16 %v595, %v594
        %v606 = vpack.c.b16 %v597, %v596
        %v607 = vpack.c.b16 %v599, %v598
        %616 = vmatprep.subr.bf16.mxu0 0
        %617 = vmatpush1.bf16.msra.mxu0 %v607
        %618 = vmatprep.subr.bf16.mxu0 0
        %619 = vmatpush1.bf16.msra.mxu0 %v606
        %620 = vmatprep.subr.bf16.mxu0 0
        %621 = vmatpush1.bf16.msra.mxu0 %v605
        %622 = vmatprep.subr.bf16.mxu0 0
        %623 = vmatpush1.bf16.msra.mxu0 %v604
        %624 = vmatprep.subr.bf16.mxu0 0
        %625 = vmatpush1.bf16.msra.mxu0 %v603
        %626 = vmatprep.subr.bf16.mxu0 0
        %627 = vmatpush1.bf16.msra.mxu0 %v602
        %628 = vmatprep.subr.bf16.mxu0 0
        %629 = vmatpush1.bf16.msra.mxu0 %v601
        %630 = vmatprep.subr.bf16.mxu0 0
        %631 = vmatpush1.bf16.msra.mxu0 %v600
        %632 = vmatprep.subr.bf16.mxu0 0
        %633 = vmatpush2.bf16.msra.mxu0 0
        %634 = vmatprep.subr.bf16.mxu0 0
        %635 = vmatpush2.bf16.msra.mxu0 0
        %636 = vmatprep.subr.bf16.mxu0 0
        %637 = vmatpush2.bf16.msra.mxu0 0
        %638 = vmatprep.subr.bf16.mxu0 0
        %639 = vmatpush2.bf16.msra.mxu0 0
        %640 = vmatprep.subr.bf16.mxu0 0
        %641 = vmatpush2.bf16.msra.mxu0 0
        %642 = vmatprep.subr.bf16.mxu0 0
        %643 = vmatpush2.bf16.msra.mxu0 0
        %644 = vmatprep.subr.bf16.mxu0 0
        %645 = vmatpush2.bf16.msra.mxu0 0
        %646 = vmatprep.subr.bf16.mxu0 0
        %647 = vmatpush2.bf16.msra.mxu0 0
        %648 = vmatprep.mubr.bf16.mxu0 0
        %649 = vmatmul.mubr.bf16.gmra.mxu0 %v529
        %v650 = vpop.f32.mrf.mxu0
        %v651 = vadd.f32 %v566, %v650
        %v652 = vpop.f32.mrf.mxu0
        %v653 = vpop.f32.mrf.mxu0
        %v654 = vadd.f32 %v566, %v653
        %v655 = vpop.f32.mrf.mxu0
        %656 = vmatprep.mubr.bf16.mxu0 0
        %657 = vmatmul.mubr.bf16.gmra.mxu0 %v530
        %v658 = vpop.f32.mrf.mxu0
        %v659 = vadd.f32 %v566, %v658
        %v660 = vpop.f32.mrf.mxu0
        %v661 = vpop.f32.mrf.mxu0
        %v662 = vadd.f32 %v566, %v661
        %v663 = vpop.f32.mrf.mxu0
        %664 = vmatprep.mubr.bf16.mxu0 0
        %665 = vmatmul.mubr.bf16.gmra.mxu0 %v531
        %v666 = vpop.f32.mrf.mxu0
        %v667 = vadd.f32 %v566, %v666
        %v668 = vpop.f32.mrf.mxu0
        %v669 = vpop.f32.mrf.mxu0
        %v670 = vadd.f32 %v566, %v669
        %v671 = vpop.f32.mrf.mxu0
        %672 = vmatprep.mubr.bf16.mxu0 0
        %673 = vmatmul.mubr.bf16.gmra.mxu0 %v532
        %v674 = vpop.f32.mrf.mxu0
        %v675 = vadd.f32 %v566, %v674
        %v676 = vpop.f32.mrf.mxu0
        %v677 = vpop.f32.mrf.mxu0
        %v678 = vadd.f32 %v566, %v677
        %v679 = vpop.f32.mrf.mxu0
        %680 = vmatprep.mubr.bf16.mxu0 0
        %681 = vmatmul.mubr.bf16.gmra.mxu0 %v533
        %v682 = vpop.f32.mrf.mxu0
        %v683 = vadd.f32 %v566, %v682
        %v684 = vpop.f32.mrf.mxu0
        %v685 = vpop.f32.mrf.mxu0
        %v686 = vadd.f32 %v566, %v685
        %v687 = vpop.f32.mrf.mxu0
        %688 = vmatprep.mubr.bf16.mxu0 0
        %689 = vmatmul.mubr.bf16.gmra.mxu0 %v534
        %v690 = vpop.f32.mrf.mxu0
        %v691 = vadd.f32 %v566, %v690
        %v692 = vpop.f32.mrf.mxu0
        %v693 = vpop.f32.mrf.mxu0
        %v694 = vadd.f32 %v566, %v693
        %v695 = vpop.f32.mrf.mxu0
        %696 = vmatprep.mubr.bf16.mxu0 0
        %697 = vmatmul.mubr.bf16.gmra.mxu0 %v535
        %v698 = vpop.f32.mrf.mxu0
        %v699 = vadd.f32 %v566, %v698
        %v700 = vpop.f32.mrf.mxu0
        %v701 = vpop.f32.mrf.mxu0
        %v702 = vadd.f32 %v566, %v701
        %v703 = vpop.f32.mrf.mxu0
        %704 = vmatprep.mubr.bf16.mxu0 0
        %705 = vmatmul.mubr.bf16.gmra.mxu0 %v536
        %v706 = vpop.f32.mrf.mxu0
        %v707 = vadd.f32 %v566, %v706
        %v708 = vpop.f32.mrf.mxu0
        %v709 = vpop.f32.mrf.mxu0
        %v710 = vadd.f32 %v566, %v709
        %v711 = vpop.f32.mrf.mxu0
        %712 = vmatprep.mubr.bf16.mxu0 0
        %713 = vmatmul.mubr.bf16.gmra.mxu0 %v537
        %v714 = vpop.f32.mrf.mxu0
        %v715 = vadd.f32 %v566, %v714
        %v716 = vpop.f32.mrf.mxu0
        %v717 = vpop.f32.mrf.mxu0
        %v718 = vadd.f32 %v566, %v717
        %v719 = vpop.f32.mrf.mxu0
        %720 = vmatprep.mubr.bf16.mxu0 0
        %721 = vmatmul.mubr.bf16.gmra.mxu0 %v538
        %v722 = vpop.f32.mrf.mxu0
        %v723 = vadd.f32 %v566, %v722
        %v724 = vpop.f32.mrf.mxu0
        %v725 = vpop.f32.mrf.mxu0
        %v726 = vadd.f32 %v566, %v725
        %v727 = vpop.f32.mrf.mxu0
        %728 = vmatprep.mubr.bf16.mxu0 0
        %729 = vmatmul.mubr.bf16.gmra.mxu0 %v539
        %v730 = vpop.f32.mrf.mxu0
        %v731 = vadd.f32 %v566, %v730
        %v732 = vpop.f32.mrf.mxu0
        %v733 = vpop.f32.mrf.mxu0
        %v734 = vadd.f32 %v566, %v733
        %v735 = vpop.f32.mrf.mxu0
        %736 = vmatprep.mubr.bf16.mxu0 0
        %737 = vmatmul.mubr.bf16.gmra.mxu0 %v540
        %v738 = vpop.f32.mrf.mxu0
        %v739 = vadd.f32 %v566, %v738
        %v740 = vpop.f32.mrf.mxu0
        %v741 = vpop.f32.mrf.mxu0
        %v742 = vadd.f32 %v566, %v741
        %v743 = vpop.f32.mrf.mxu0
        %744 = vmatprep.mubr.bf16.mxu0 0
        %745 = vmatmul.mubr.bf16.gmra.mxu0 %v541
        %v746 = vpop.f32.mrf.mxu0
        %v747 = vadd.f32 %v566, %v746
        %v748 = vpop.f32.mrf.mxu0
        %v749 = vpop.f32.mrf.mxu0
        %v750 = vadd.f32 %v566, %v749
        %v751 = vpop.f32.mrf.mxu0
        %752 = vmatprep.mubr.bf16.mxu0 0
        %753 = vmatmul.mubr.bf16.gmra.mxu0 %v542
        %v754 = vpop.f32.mrf.mxu0
        %v755 = vadd.f32 %v566, %v754
        %v756 = vpop.f32.mrf.mxu0
        %v757 = vpop.f32.mrf.mxu0
        %v758 = vadd.f32 %v566, %v757
        %v759 = vpop.f32.mrf.mxu0
        %760 = vmatprep.mubr.bf16.mxu0 0
        %761 = vmatmul.mubr.bf16.gmra.mxu0 %v543
        %v762 = vpop.f32.mrf.mxu0
        %v763 = vadd.f32 %v566, %v762
        %v764 = vpop.f32.mrf.mxu0
        %v765 = vpop.f32.mrf.mxu0
        %v766 = vadd.f32 %v566, %v765
        %v767 = vpop.f32.mrf.mxu0
        %768 = vmatprep.mubr.bf16.mxu0 0
        %769 = vmatmul.mubr.bf16.gmra.mxu0 %v544
        %v770 = vpop.f32.mrf.mxu0
        %v771 = vadd.f32 %v566, %v770
        %v772 = vpop.f32.mrf.mxu0
        %v773 = vpop.f32.mrf.mxu0
        %v774 = vadd.f32 %v566, %v773
        %v775 = vpop.f32.mrf.mxu0
        %776 = vdwg.mxu0
        %v777 = vmax.f32 %v651, 0.0
        %v778 = vmax.f32 %v654, 0.0
        %v779 = vmax.f32 %v659, 0.0
        %v780 = vmax.f32 %v662, 0.0
        %v781 = vmax.f32 %v667, 0.0
        %v782 = vmax.f32 %v670, 0.0
        %v783 = vmax.f32 %v675, 0.0
        %v784 = vmax.f32 %v678, 0.0
        %v785 = vmax.f32 %v683, 0.0
        %v786 = vmax.f32 %v686, 0.0
        %v787 = vmax.f32 %v691, 0.0
        %v788 = vmax.f32 %v694, 0.0
        %v789 = vmax.f32 %v699, 0.0
        %v790 = vmax.f32 %v702, 0.0
        %v791 = vmax.f32 %v707, 0.0
        %v792 = vmax.f32 %v710, 0.0
        %v793 = vmax.f32 %v715, 0.0
        %v794 = vmax.f32 %v718, 0.0
        %v795 = vmax.f32 %v723, 0.0
        %v796 = vmax.f32 %v726, 0.0
        %v797 = vmax.f32 %v731, 0.0
        %v798 = vmax.f32 %v734, 0.0
        %v799 = vmax.f32 %v739, 0.0
        %v800 = vmax.f32 %v742, 0.0
        %v801 = vmax.f32 %v747, 0.0
        %v802 = vmax.f32 %v750, 0.0
        %v803 = vmax.f32 %v755, 0.0
        %v804 = vmax.f32 %v758, 0.0
        %v805 = vmax.f32 %v763, 0.0
        %v806 = vmax.f32 %v766, 0.0
        %v807 = vmax.f32 %v771, 0.0
        %v808 = vmax.f32 %v774, 0.0
        %v809 = vpack.c.bf16 %v778, %v777
        %v810 = vpack.c.bf16 %v780, %v779
        %v811 = vpack.c.bf16 %v782, %v781
        %v812 = vpack.c.bf16 %v784, %v783
        %v813 = vpack.c.bf16 %v786, %v785
        %v814 = vpack.c.bf16 %v788, %v787
        %v815 = vpack.c.bf16 %v790, %v789
        %v816 = vpack.c.bf16 %v792, %v791
        %v817 = vpack.c.bf16 %v794, %v793
        %v818 = vpack.c.bf16 %v796, %v795
        %v819 = vpack.c.bf16 %v798, %v797
        %v820 = vpack.c.bf16 %v800, %v799
        %v821 = vpack.c.bf16 %v802, %v801
        %v822 = vpack.c.bf16 %v804, %v803
        %v823 = vpack.c.bf16 %v806, %v805
        %v824 = vpack.c.bf16 %v808, %v807
        %s825 = scalar_lea.vmem %s3, 64
        %v826 = vld [vmem:[%s825] sm:$0xf]
        %v827 = vld [vmem:[%s825 + $0x4] sm:$0xf]
        %v828 = vld [vmem:[%s825 + $0x8] sm:$0xf]
        %v829 = vld [vmem:[%s825 + $0xc] sm:$0xf]
        %v830 = vld [vmem:[%s825 + $0x10] sm:$0xf]
        %v831 = vld [vmem:[%s825 + $0x14] sm:$0xf]
        %v832 = vld [vmem:[%s825 + $0x18] sm:$0xf]
        %v833 = vld [vmem:[%s825 + $0x1c] sm:$0xf]
        %v834 = vld [vmem:[%s825 + $0x20] sm:$0xf]
        %v835 = vld [vmem:[%s825 + $0x24] sm:$0xf]
        %v836 = vld [vmem:[%s825 + $0x28] sm:$0xf]
        %v837 = vld [vmem:[%s825 + $0x2c] sm:$0xf]
        %v838 = vld [vmem:[%s825 + $0x30] sm:$0xf]
        %v839 = vld [vmem:[%s825 + $0x34] sm:$0xf]
        %v840 = vld [vmem:[%s825 + $0x38] sm:$0xf]
        %v841 = vld [vmem:[%s825 + $0x3c] sm:$0xf]
        %s842 = scalar_lea.vmem %s4, 1
        %v843 = vld [vmem:[%s842] sm:$0x1]
        %v845 = vlaneseq
        %v846 = vshrl.u32 %v845, 7
        %v847 = vsub.s32 0, %v846
        %v848 = vrot.slane %v843, %v847
        %v866 = vunpack.c.l.b16 %v826
        %v867 = vunpack.c.l.b16 %v827
        %v868 = vunpack.c.l.b16 %v828
        %v869 = vunpack.c.l.b16 %v829
        %v870 = vunpack.c.l.b16 %v830
        %v871 = vunpack.c.l.b16 %v831
        %v872 = vunpack.c.l.b16 %v832
        %v873 = vunpack.c.l.b16 %v833
        %v874 = vunpack.c.l.b16 %v834
        %v875 = vunpack.c.l.b16 %v835
        %v876 = vunpack.c.l.b16 %v836
        %v877 = vunpack.c.l.b16 %v837
        %v878 = vunpack.c.l.b16 %v838
        %v879 = vunpack.c.l.b16 %v839
        %v880 = vunpack.c.l.b16 %v840
        %v881 = vunpack.c.l.b16 %v841
        %v882 = vpack.c.b16 %v867, %v866
        %v883 = vpack.c.b16 %v869, %v868
        %v884 = vpack.c.b16 %v871, %v870
        %v885 = vpack.c.b16 %v873, %v872
        %v886 = vpack.c.b16 %v875, %v874
        %v887 = vpack.c.b16 %v877, %v876
        %v888 = vpack.c.b16 %v879, %v878
        %v889 = vpack.c.b16 %v881, %v880
        %898 = vmatprep.subr.bf16.mxu0 0
        %899 = vmatpush1.bf16.msra.mxu0 %v889
        %900 = vmatprep.subr.bf16.mxu0 0
        %901 = vmatpush1.bf16.msra.mxu0 %v888
        %902 = vmatprep.subr.bf16.mxu0 0
        %903 = vmatpush1.bf16.msra.mxu0 %v887
        %904 = vmatprep.subr.bf16.mxu0 0
        %905 = vmatpush1.bf16.msra.mxu0 %v886
        %906 = vmatprep.subr.bf16.mxu0 0
        %907 = vmatpush1.bf16.msra.mxu0 %v885
        %908 = vmatprep.subr.bf16.mxu0 0
        %909 = vmatpush1.bf16.msra.mxu0 %v884
        %910 = vmatprep.subr.bf16.mxu0 0
        %911 = vmatpush1.bf16.msra.mxu0 %v883
        %912 = vmatprep.subr.bf16.mxu0 0
        %913 = vmatpush1.bf16.msra.mxu0 %v882
        %914 = vmatprep.subr.bf16.mxu0 0
        %915 = vmatpush2.bf16.msra.mxu0 0
        %916 = vmatprep.subr.bf16.mxu0 0
        %917 = vmatpush2.bf16.msra.mxu0 0
        %918 = vmatprep.subr.bf16.mxu0 0
        %919 = vmatpush2.bf16.msra.mxu0 0
        %920 = vmatprep.subr.bf16.mxu0 0
        %921 = vmatpush2.bf16.msra.mxu0 0
        %922 = vmatprep.subr.bf16.mxu0 0
        %923 = vmatpush2.bf16.msra.mxu0 0
        %924 = vmatprep.subr.bf16.mxu0 0
        %925 = vmatpush2.bf16.msra.mxu0 0
        %926 = vmatprep.subr.bf16.mxu0 0
        %927 = vmatpush2.bf16.msra.mxu0 0
        %928 = vmatprep.subr.bf16.mxu0 0
        %929 = vmatpush2.bf16.msra.mxu0 0
        %930 = vmatprep.mubr.bf16.mxu0 0
        %931 = vmatmul.mubr.bf16.gmra.mxu0 %v809
        %v932 = vpop.f32.mrf.mxu0
        %v933 = vadd.f32 %v848, %v932
        %v934 = vpop.f32.mrf.mxu0
        %v935 = vpop.f32.mrf.mxu0
        %v936 = vadd.f32 %v848, %v935
        %v937 = vpop.f32.mrf.mxu0
        %938 = vmatprep.mubr.bf16.mxu0 0
        %939 = vmatmul.mubr.bf16.gmra.mxu0 %v810
        %v940 = vpop.f32.mrf.mxu0
        %v941 = vadd.f32 %v848, %v940
        %v942 = vpop.f32.mrf.mxu0
        %v943 = vpop.f32.mrf.mxu0
        %v944 = vadd.f32 %v848, %v943
        %v945 = vpop.f32.mrf.mxu0
        %946 = vmatprep.mubr.bf16.mxu0 0
        %947 = vmatmul.mubr.bf16.gmra.mxu0 %v811
        %v948 = vpop.f32.mrf.mxu0
        %v949 = vadd.f32 %v848, %v948
        %v950 = vpop.f32.mrf.mxu0
        %v951 = vpop.f32.mrf.mxu0
        %v952 = vadd.f32 %v848, %v951
        %v953 = vpop.f32.mrf.mxu0
        %954 = vmatprep.mubr.bf16.mxu0 0
        %955 = vmatmul.mubr.bf16.gmra.mxu0 %v812
        %v956 = vpop.f32.mrf.mxu0
        %v957 = vadd.f32 %v848, %v956
        %v958 = vpop.f32.mrf.mxu0
        %v959 = vpop.f32.mrf.mxu0
        %v960 = vadd.f32 %v848, %v959
        %v961 = vpop.f32.mrf.mxu0
        %962 = vmatprep.mubr.bf16.mxu0 0
        %963 = vmatmul.mubr.bf16.gmra.mxu0 %v813
        %v964 = vpop.f32.mrf.mxu0
        %v965 = vadd.f32 %v848, %v964
        %v966 = vpop.f32.mrf.mxu0
        %v967 = vpop.f32.mrf.mxu0
        %v968 = vadd.f32 %v848, %v967
        %v969 = vpop.f32.mrf.mxu0
        %970 = vmatprep.mubr.bf16.mxu0 0
        %971 = vmatmul.mubr.bf16.gmra.mxu0 %v814
        %v972 = vpop.f32.mrf.mxu0
        %v973 = vadd.f32 %v848, %v972
        %v974 = vpop.f32.mrf.mxu0
        %v975 = vpop.f32.mrf.mxu0
        %v976 = vadd.f32 %v848, %v975
        %v977 = vpop.f32.mrf.mxu0
        %978 = vmatprep.mubr.bf16.mxu0 0
        %979 = vmatmul.mubr.bf16.gmra.mxu0 %v815
        %v980 = vpop.f32.mrf.mxu0
        %v981 = vadd.f32 %v848, %v980
        %v982 = vpop.f32.mrf.mxu0
        %v983 = vpop.f32.mrf.mxu0
        %v984 = vadd.f32 %v848, %v983
        %v985 = vpop.f32.mrf.mxu0
        %986 = vmatprep.mubr.bf16.mxu0 0
        %987 = vmatmul.mubr.bf16.gmra.mxu0 %v816
        %v988 = vpop.f32.mrf.mxu0
        %v989 = vadd.f32 %v848, %v988
        %v990 = vpop.f32.mrf.mxu0
        %v991 = vpop.f32.mrf.mxu0
        %v992 = vadd.f32 %v848, %v991
        %v993 = vpop.f32.mrf.mxu0
        %994 = vmatprep.mubr.bf16.mxu0 0
        %995 = vmatmul.mubr.bf16.gmra.mxu0 %v817
        %v996 = vpop.f32.mrf.mxu0
        %v997 = vadd.f32 %v848, %v996
        %v998 = vpop.f32.mrf.mxu0
        %v999 = vpop.f32.mrf.mxu0
        %v1000 = vadd.f32 %v848, %v999
        %v1001 = vpop.f32.mrf.mxu0
        %1002 = vmatprep.mubr.bf16.mxu0 0
        %1003 = vmatmul.mubr.bf16.gmra.mxu0 %v818
        %v1004 = vpop.f32.mrf.mxu0
        %v1005 = vadd.f32 %v848, %v1004
        %v1006 = vpop.f32.mrf.mxu0
        %v1007 = vpop.f32.mrf.mxu0
        %v1008 = vadd.f32 %v848, %v1007
        %v1009 = vpop.f32.mrf.mxu0
        %1010 = vmatprep.mubr.bf16.mxu0 0
        %1011 = vmatmul.mubr.bf16.gmra.mxu0 %v819
        %v1012 = vpop.f32.mrf.mxu0
        %v1013 = vadd.f32 %v848, %v1012
        %v1014 = vpop.f32.mrf.mxu0
        %v1015 = vpop.f32.mrf.mxu0
        %v1016 = vadd.f32 %v848, %v1015
        %v1017 = vpop.f32.mrf.mxu0
        %1018 = vmatprep.mubr.bf16.mxu0 0
        %1019 = vmatmul.mubr.bf16.gmra.mxu0 %v820
        %v1020 = vpop.f32.mrf.mxu0
        %v1021 = vadd.f32 %v848, %v1020
        %v1022 = vpop.f32.mrf.mxu0
        %v1023 = vpop.f32.mrf.mxu0
        %v1024 = vadd.f32 %v848, %v1023
        %v1025 = vpop.f32.mrf.mxu0
        %1026 = vmatprep.mubr.bf16.mxu0 0
        %1027 = vmatmul.mubr.bf16.gmra.mxu0 %v821
        %v1028 = vpop.f32.mrf.mxu0
        %v1029 = vadd.f32 %v848, %v1028
        %v1030 = vpop.f32.mrf.mxu0
        %v1031 = vpop.f32.mrf.mxu0
        %v1032 = vadd.f32 %v848, %v1031
        %v1033 = vpop.f32.mrf.mxu0
        %1034 = vmatprep.mubr.bf16.mxu0 0
        %1035 = vmatmul.mubr.bf16.gmra.mxu0 %v822
        %v1036 = vpop.f32.mrf.mxu0
        %v1037 = vadd.f32 %v848, %v1036
        %v1038 = vpop.f32.mrf.mxu0
        %v1039 = vpop.f32.mrf.mxu0
        %v1040 = vadd.f32 %v848, %v1039
        %v1041 = vpop.f32.mrf.mxu0
        %1042 = vmatprep.mubr.bf16.mxu0 0
        %1043 = vmatmul.mubr.bf16.gmra.mxu0 %v823
        %v1044 = vpop.f32.mrf.mxu0
        %v1045 = vadd.f32 %v848, %v1044
        %v1046 = vpop.f32.mrf.mxu0
        %v1047 = vpop.f32.mrf.mxu0
        %v1048 = vadd.f32 %v848, %v1047
        %v1049 = vpop.f32.mrf.mxu0
        %1050 = vmatprep.mubr.bf16.mxu0 0
        %1051 = vmatmul.mubr.bf16.gmra.mxu0 %v824
        %v1052 = vpop.f32.mrf.mxu0
        %v1053 = vadd.f32 %v848, %v1052
        %v1054 = vpop.f32.mrf.mxu0
        %v1055 = vpop.f32.mrf.mxu0
        %v1056 = vadd.f32 %v848, %v1055
        %v1057 = vpop.f32.mrf.mxu0
        %1058 = vdwg.mxu0
        %v1059 = vmax.f32 %v933, 0.0
        %v1060 = vmax.f32 %v936, 0.0
        %v1061 = vmax.f32 %v941, 0.0
        %v1062 = vmax.f32 %v944, 0.0
        %v1063 = vmax.f32 %v949, 0.0
        %v1064 = vmax.f32 %v952, 0.0
        %v1065 = vmax.f32 %v957, 0.0
        %v1066 = vmax.f32 %v960, 0.0
        %v1067 = vmax.f32 %v965, 0.0
        %v1068 = vmax.f32 %v968, 0.0
        %v1069 = vmax.f32 %v973, 0.0
        %v1070 = vmax.f32 %v976, 0.0
        %v1071 = vmax.f32 %v981, 0.0
        %v1072 = vmax.f32 %v984, 0.0
        %v1073 = vmax.f32 %v989, 0.0
        %v1074 = vmax.f32 %v992, 0.0
        %v1075 = vmax.f32 %v997, 0.0
        %v1076 = vmax.f32 %v1000, 0.0
        %v1077 = vmax.f32 %v1005, 0.0
        %v1078 = vmax.f32 %v1008, 0.0
        %v1079 = vmax.f32 %v1013, 0.0
        %v1080 = vmax.f32 %v1016, 0.0
        %v1081 = vmax.f32 %v1021, 0.0
        %v1082 = vmax.f32 %v1024, 0.0
        %v1083 = vmax.f32 %v1029, 0.0
        %v1084 = vmax.f32 %v1032, 0.0
        %v1085 = vmax.f32 %v1037, 0.0
        %v1086 = vmax.f32 %v1040, 0.0
        %v1087 = vmax.f32 %v1045, 0.0
        %v1088 = vmax.f32 %v1048, 0.0
        %v1089 = vmax.f32 %v1053, 0.0
        %v1090 = vmax.f32 %v1056, 0.0
        %1091 = vst [vmem:[%s218] sm:$0xff] %v1059
        %1092 = vst [vmem:[%s218 + $0x8] sm:$0xff] %v1060
        %1093 = vst [vmem:[%s218 + $0x10] sm:$0xff] %v1061
        %1094 = vst [vmem:[%s218 + $0x18] sm:$0xff] %v1062
        %1095 = vst [vmem:[%s218 + $0x20] sm:$0xff] %v1063
        %1096 = vst [vmem:[%s218 + $0x28] sm:$0xff] %v1064
        %1097 = vst [vmem:[%s218 + $0x30] sm:$0xff] %v1065
        %1098 = vst [vmem:[%s218 + $0x38] sm:$0xff] %v1066
        %1099 = vst [vmem:[%s218 + $0x40] sm:$0xff] %v1067
        %1100 = vst [vmem:[%s218 + $0x48] sm:$0xff] %v1068
        %1101 = vst [vmem:[%s218 + $0x50] sm:$0xff] %v1069
        %1102 = vst [vmem:[%s218 + $0x58] sm:$0xff] %v1070
        %1103 = vst [vmem:[%s218 + $0x60] sm:$0xff] %v1071
        %1104 = vst [vmem:[%s218 + $0x68] sm:$0xff] %v1072
        %1105 = vst [vmem:[%s218 + $0x70] sm:$0xff] %v1073
        %1106 = vst [vmem:[%s218 + $0x78] sm:$0xff] %v1074
        %1107 = vst [vmem:[%s218 + $0x80] sm:$0xff] %v1075
        %1108 = vst [vmem:[%s218 + $0x88] sm:$0xff] %v1076
        %1109 = vst [vmem:[%s218 + $0x90] sm:$0xff] %v1077
        %1110 = vst [vmem:[%s218 + $0x98] sm:$0xff] %v1078
        %1111 = vst [vmem:[%s218 + $0xa0] sm:$0xff] %v1079
        %1112 = vst [vmem:[%s218 + $0xa8] sm:$0xff] %v1080
        %1113 = vst [vmem:[%s218 + $0xb0] sm:$0xff] %v1081
        %1114 = vst [vmem:[%s218 + $0xb8] sm:$0xff] %v1082
        %1115 = vst [vmem:[%s218 + $0xc0] sm:$0xff] %v1083
        %1116 = vst [vmem:[%s218 + $0xc8] sm:$0xff] %v1084
        %1117 = vst [vmem:[%s218 + $0xd0] sm:$0xff] %v1085
        %1118 = vst [vmem:[%s218 + $0xd8] sm:$0xff] %v1086
        %1119 = vst [vmem:[%s218 + $0xe0] sm:$0xff] %v1087
        %1120 = vst [vmem:[%s218 + $0xe8] sm:$0xff] %v1088
        %1121 = vst [vmem:[%s218 + $0xf0] sm:$0xff] %v1089
        %1122 = vst [vmem:[%s218 + $0xf8] sm:$0xff] %v1090
        %s1123 = sand.u32 %s137, 1
        %s1124 = scalar_lea.sflag [#allocation3], %s1123
        %s1125 = sand.u32 %s137, 1
        %s1126 = smul.addr %s1125, 256
        %s1127 = scalar_lea.vmem [#allocation2], %s1126
        // Predicated region
        $region41: #{_forward_impl.1} parent=39 // pred_check
          %p1128 = pneg %p147
        $region42: #{_forward_impl.1} parent=39 // pred_check_branch
          %1130 = sbr.rel (%p1128) target = $region44
        $region43: #{_forward_impl.1} parent=39 // pred_region
          %s1131 = smul.u32 32, %s19
          %s1133 = ssub.s32 4096, 4096
          %1134 = vsyncadd %s1124, %s1133
          %s1135 = smul.addr %s1131, 128
          %s1136 = scalar_lea.hbm %s5, %s1135
          %s1137 = sshll.u32 %s1127, 4
          %s1138 = int_to_ptr.vmem [resolvable:$true] %s1137
          %1143 = dma.vmem_to_hbm [thread:$0]  %s1138, 4096, %s1136, %s1124, 128, 128, 8
        $region44: #{_forward_impl.1} parent=39 // pred_fallthru
          _
      $region40: #{_forward_impl.1} parent=5 // pred_fallthru
        _
      %p1144 = scmp.le.s32.totalorder 2, %s14
      // Predicated region
      $region45: #{_forward_impl.1} parent=5 // pred_check
        %p1145 = pneg %p1144
      $region46: #{_forward_impl.1} parent=5 // pred_check_branch
        %1147 = sbr.rel (%p1145) target = $region48
      $region47: #{_forward_impl.1} parent=5 // pred_region
        %s1148 = ssub.s32 %s14, 2
        // Predicated region
        $region49: #{_forward_impl.1} parent=47 // pred_check
          %p1149 = pneg %p153
        $region50: #{_forward_impl.1} parent=47 // pred_check_branch
          %1151 = sbr.rel (%p1149) target = $region52
        $region51: #{_forward_impl.1} parent=47 // pred_region
          %s1152 = sand.u32 %s138, 1
          %s1153 = scalar_lea.sflag [#allocation3], %s1152
          %s1154 = sand.u32 %s138, 1
          %s1155 = smul.addr %s1154, 256
          %s1156 = scalar_lea.vmem [#allocation2], %s1155
          %1157 = dma.done %s1153, 4096
        $region52: #{_forward_impl.1} parent=47 // pred_fallthru
          _
      $region48: #{_forward_impl.1} parent=5 // pred_fallthru
        _
    $region6: #{_forward_impl.1} parent=1 // loop_footer
      %s18 = sadd.s32 1, %s14
    $region7: #{_forward_impl.1} parent=1 // loop_footer_branch
      %13 = sbr.rel target = $region3
    $region8: #{_forward_impl.1} parent=1 // loop_exit
      _
    %1158 = vsyncpa [#allocation3], 1
    %s1159 = scalar_lea.sflag [#allocation3], 1
    %1160 = vsyncpa %s1159, 1

</llo_original>
